<compile_context>
chip_gen: v5e
topology: v5e:2x2
jax: 0.10.0
libtpu: 0.0.40
codegen_flags: <defaults>
</compile_context>

<pallas_src>
import jax
import jax.numpy as jnp
from jax.experimental import pallas as pl
from jax.experimental.pallas import tpu as pltpu

# ----- problem sizes (small, consistent with the module) -----
D_MODEL = 32
NHEAD = 4
HEAD_DIM = D_MODEL // NHEAD
DIM_FF = 64
SEQ = 8          # num_elements
BATCH = 2
NUM_LAYERS = 2
TB = SEQ * BATCH # folded rows = 16
EPS = 1e-5

# ----- packed-weight slab layout (per layer), 128 lanes wide, all at lane offset 0 -----
ROW_WQK = 0                      # rows [0,32)   : [Wq^T (pre-scaled) | Wk^T]  (E, 2E)
ROW_WV = D_MODEL                 # rows [32,64)  : Wv^T                        (E, E)
ROW_WO = 2 * D_MODEL             # rows [64,96)  : Wout^T                      (E, E)
ROW_W1 = 3 * D_MODEL             # rows [96,128) : W1^T (linear1)              (E, FF)
ROW_W2 = 4 * D_MODEL             # rows [128,192): W2^T (linear2)              (FF, E)
ROW_VEC = 4 * D_MODEL + DIM_FF   # row 192+ : bias / layernorm vectors, one per row:
#   +0: [bq*scale | bk]   +1: bv      +2: out_proj bias
#   +3: linear1 bias      +4: linear2 bias
#   +5: norm1 gamma  +6: norm1 beta  +7: norm2 gamma  +8: norm2 beta
SLAB_ROWS = 208                  # 201 rounded up to a multiple of 8
SLAB_LANES = 128


# -------------------- in-kernel helpers --------------------
def _layer_norm(x, gamma, beta):
    mean = jnp.mean(x, axis=-1, keepdims=True)
    var = jnp.mean(jnp.square(x - mean), axis=-1, keepdims=True)
    return (x - mean) * jax.lax.rsqrt(var + EPS) * gamma + beta


# -------------------- Pallas kernel --------------------
def encoder_kernel(src_ref, pos_ref, w_ref, out_ref):
    x = src_ref[...]      # (TB, E), rows ordered (t*BATCH + b)
    pos = pos_ref[...]    # (TB, E)

    # Block-diagonal additive attention bias over the folded rows: a query row may only
    # attend to key rows of the same batch element.
    row_b = jax.lax.broadcasted_iota(jnp.int32, (TB, TB), 0) % BATCH
    col_b = jax.lax.broadcasted_iota(jnp.int32, (TB, TB), 1) % BATCH
    attn_bias = jnp.where(row_b == col_b, 0.0, -1e30).astype(jnp.float32)

    for layer in range(NUM_LAYERS):  # static unroll: tiny fixed depth
        def wm(r0, nrows, ncols, _l=layer):
            return w_ref[_l, r0:r0 + nrows, 0:ncols]

        wqk = wm(ROW_WQK, D_MODEL, 2 * D_MODEL)   # (E, 2E)
        wv = wm(ROW_WV, D_MODEL, D_MODEL)         # (E, E)
        w1 = wm(ROW_W1, D_MODEL, DIM_FF)          # (E, FF)
        w2 = wm(ROW_W2, DIM_FF, D_MODEL)          # (FF, E)
        bqk = wm(ROW_VEC + 0, 1, 2 * D_MODEL)     # (1, 2E)
        bv = wm(ROW_VEC + 1, 1, D_MODEL)
        bo = wm(ROW_VEC + 2, 1, D_MODEL)
        b1 = wm(ROW_VEC + 3, 1, DIM_FF)
        b2 = wm(ROW_VEC + 4, 1, D_MODEL)
        n1g = wm(ROW_VEC + 5, 1, D_MODEL)
        n1b = wm(ROW_VEC + 6, 1, D_MODEL)
        n2g = wm(ROW_VEC + 7, 1, D_MODEL)
        n2b = wm(ROW_VEC + 8, 1, D_MODEL)

        # ---- self attention (forward_post): q = k = x + pos, v = x ----
        xp = x + pos
        qk = jnp.dot(xp, wqk, preferred_element_type=jnp.float32) + bqk   # (TB, 2E) = [Q|K]
        v = jnp.dot(x, wv, preferred_element_type=jnp.float32) + bv       # (TB, E)

        attn = jnp.zeros((TB, D_MODEL), dtype=jnp.float32)
        for h in range(NHEAD):
            lo = h * HEAD_DIM
            qh = qk[:, lo:lo + HEAD_DIM]                        # (TB, hd), pre-scaled
            kh = qk[:, D_MODEL + lo:D_MODEL + lo + HEAD_DIM]    # (TB, hd)
            vh = v[:, lo:lo + HEAD_DIM]                         # (TB, hd)

            s = jnp.einsum("nd,md->nm", qh, kh,
                           preferred_element_type=jnp.float32) + attn_bias
            m = jnp.max(s, axis=-1, keepdims=True)
            e = jnp.exp(s - m)
            p = e * pl.reciprocal(jnp.sum(e, axis=-1, keepdims=True), approx=True)
            oh = jnp.dot(p, vh, preferred_element_type=jnp.float32)        # (TB, hd)

            # fold the output projection into the head loop: attn += oh @ (Wout^T)[head rows]
            woh = w_ref[layer, ROW_WO + lo:ROW_WO + lo + HEAD_DIM, 0:D_MODEL]
            attn = attn + jnp.dot(oh, woh, preferred_element_type=jnp.float32)
        attn = attn + bo

        x = _layer_norm(x + attn, n1g, n1b)

        # ---- feed-forward (relu) ----
        hdn = jnp.maximum(jnp.dot(x, w1, preferred_element_type=jnp.float32) + b1, 0.0)
        ff = jnp.dot(hdn, w2, preferred_element_type=jnp.float32) + b2
        x = _layer_norm(x + ff, n2g, n2b)

    out_ref[...] = x


# -------------------- wrapper --------------------
def transformer_encoder(src_lne, pos_lne, packed_w):
    """src/pos: (SEQ, BATCH, E) (PyTorch layout); packed_w: (NUM_LAYERS, SLAB_ROWS, 128).

    Returns (SEQ, BATCH, E).  Only free reshapes around the kernel (no transposes).
    """
    src2d = src_lne.reshape(TB, D_MODEL)
    pos2d = pos_lne.reshape(TB, D_MODEL)

    out = pl.pallas_call(
        encoder_kernel,
        out_shape=jax.ShapeDtypeStruct((TB, D_MODEL), jnp.float32),
        grid=(1,),
        in_specs=[
            pl.BlockSpec((TB, D_MODEL), lambda i: (0, 0)),
            pl.BlockSpec((TB, D_MODEL), lambda i: (0, 0)),
            pl.BlockSpec((NUM_LAYERS, SLAB_ROWS, SLAB_LANES), lambda i: (0, 0, 0)),
        ],
        out_specs=pl.BlockSpec((TB, D_MODEL), lambda i: (0, 0)),
        compiler_params=pltpu.CompilerParams(dimension_semantics=("arbitrary",)),
    )(src2d, pos2d, packed_w)

    return out.reshape(SEQ, BATCH, D_MODEL)


# -------------------- host-side weight packing --------------------
def pack_params(layer_params):
    """Pack per-layer PyTorch-format weights into one (L, SLAB_ROWS, 128) f32 slab.

    Pre-transposes every matrix (kernel only does x @ w), pre-scales Wq / bq by
    1/sqrt(head_dim), and fuses Wq|Wk so the shared q/k projection is one matmul.
    """
    scale = HEAD_DIM ** -0.5
    slabs = []
    for p in layer_params:
        iw, ib = p["in_proj_w"], p["in_proj_b"]
        wq_t = iw[:D_MODEL].T * scale
        wk_t = iw[D_MODEL:2 * D_MODEL].T
        wv_t = iw[2 * D_MODEL:].T
        bq = ib[:D_MODEL] * scale
        bk = ib[D_MODEL:2 * D_MODEL]
        bv = ib[2 * D_MODEL:]

        s = jnp.zeros((SLAB_ROWS, SLAB_LANES), jnp.float32)
        s = s.at[ROW_WQK:ROW_WQK + D_MODEL, 0:2 * D_MODEL].set(
            jnp.concatenate([wq_t, wk_t], axis=1))
        s = s.at[ROW_WV:ROW_WV + D_MODEL, 0:D_MODEL].set(wv_t)
        s = s.at[ROW_WO:ROW_WO + D_MODEL, 0:D_MODEL].set(p["out_proj_w"].T)
        s = s.at[ROW_W1:ROW_W1 + D_MODEL, 0:DIM_FF].set(p["linear1_w"].T)
        s = s.at[ROW_W2:ROW_W2 + DIM_FF, 0:D_MODEL].set(p["linear2_w"].T)
        s = s.at[ROW_VEC + 0, 0:2 * D_MODEL].set(jnp.concatenate([bq, bk]))
        s = s.at[ROW_VEC + 1, 0:D_MODEL].set(bv)
        s = s.at[ROW_VEC + 2, 0:D_MODEL].set(p["out_proj_b"])
        s = s.at[ROW_VEC + 3, 0:DIM_FF].set(p["linear1_b"])
        s = s.at[ROW_VEC + 4, 0:D_MODEL].set(p["linear2_b"])
        s = s.at[ROW_VEC + 5, 0:D_MODEL].set(p["norm1_g"])
        s = s.at[ROW_VEC + 6, 0:D_MODEL].set(p["norm1_b"])
        s = s.at[ROW_VEC + 7, 0:D_MODEL].set(p["norm2_g"])
        s = s.at[ROW_VEC + 8, 0:D_MODEL].set(p["norm2_b"])
        slabs.append(s)
    return jnp.stack(slabs, axis=0)


# -------------------- independent pure-JAX reference (PyTorch semantics) --------------------
def _ref_layer_norm(x, gamma, beta):
    mean = jnp.mean(x, axis=-1, keepdims=True)
    var = jnp.mean((x - mean) ** 2, axis=-1, keepdims=True)
    return (x - mean) / jnp.sqrt(var + EPS) * gamma + beta


def _ref_mha(q_in, k_in, v_in, in_w, in_b, out_w, out_b):
    """nn.MultiheadAttention semantics for a single batch element (no masks, eval mode)."""
    q = q_in @ in_w[:D_MODEL].T + in_b[:D_MODEL]
    k = k_in @ in_w[D_MODEL:2 * D_MODEL].T + in_b[D_MODEL:2 * D_MODEL]
    v = v_in @ in_w[2 * D_MODEL:].T + in_b[2 * D_MODEL:]
    q = q * (HEAD_DIM ** -0.5)
    outs = []
    for h in range(NHEAD):
        sl = slice(h * HEAD_DIM, (h + 1) * HEAD_DIM)
        s = q[:, sl] @ k[:, sl].T
        p = jax.nn.softmax(s, axis=-1)
        outs.append(p @ v[:, sl])
    a = jnp.concatenate(outs, axis=-1)
    return a @ out_w.T + out_b


def _ref_encoder_layer(x, pos, p):
    q = x + pos
    x2 = _ref_mha(q, q, x, p["in_proj_w"], p["in_proj_b"],
                  p["out_proj_w"], p["out_proj_b"])
    x = _ref_layer_norm(x + x2, p["norm1_g"], p["norm1_b"])
    h = jax.nn.relu(x @ p["linear1_w"].T + p["linear1_b"])
    x2 = h @ p["linear2_w"].T + p["linear2_b"]
    return _ref_layer_norm(x + x2, p["norm2_g"], p["norm2_b"])


def transformer_encoder_ref(src_lne, pos_lne, layer_params):
    def one_batch(x_b, pos_b):
        x = x_b
        for p in layer_params:
            x = _ref_encoder_layer(x, pos_b, p)
        return x
    return jax.vmap(one_batch, in_axes=(1, 1), out_axes=1)(src_lne, pos_lne)


# -------------------- deterministic parameter init (PyTorch-format, per layer) --------------------
def init_layer_params(key):
    ks = jax.random.split(key, 8)
    w = lambda k, shape: 0.1 * jax.random.normal(k, shape, dtype=jnp.float32)
    return {
        "in_proj_w": w(ks[0], (3 * D_MODEL, D_MODEL)),
        "in_proj_b": w(ks[1], (3 * D_MODEL,)),
        "out_proj_w": w(ks[2], (D_MODEL, D_MODEL)),
        "out_proj_b": w(ks[3], (D_MODEL,)),
        "linear1_w": w(ks[4], (DIM_FF, D_MODEL)),
        "linear1_b": w(ks[5], (DIM_FF,)),
        "linear2_w": w(ks[6], (D_MODEL, DIM_FF)),
        "linear2_b": w(ks[7], (D_MODEL,)),
        # LayerNorm default init
        "norm1_g": jnp.ones((D_MODEL,), jnp.float32),
        "norm1_b": jnp.zeros((D_MODEL,), jnp.float32),
        "norm2_g": jnp.ones((D_MODEL,), jnp.float32),
        "norm2_b": jnp.zeros((D_MODEL,), jnp.float32),
    }


if __name__ == "__main__":
    key = jax.random.PRNGKey(0)
    k_src, k_pos, k_par = jax.random.split(key, 3)

    # PyTorch layout: (num_elements, batch_size, num_features)
    src = jax.random.normal(k_src, (SEQ, BATCH, D_MODEL), dtype=jnp.float32)
    pos = jax.random.normal(k_pos, (SEQ, BATCH, D_MODEL), dtype=jnp.float32)

    layer_params = [init_layer_params(k) for k in jax.random.split(k_par, NUM_LAYERS)]
    packed_w = pack_params(layer_params)

    out = transformer_encoder(src, pos, packed_w)
    out = jax.block_until_ready(out)

    ref = transformer_encoder_ref(src, pos, layer_params)
    ref = jax.block_until_ready(ref)

    assert out.shape == (SEQ, BATCH, D_MODEL)
    # tolerance accounts for the EUP approximate-reciprocal softmax denominator
    # (pl.reciprocal(approx=True)); structural/indexing bugs would show up as O(0.1) errors.
    assert jnp.allclose(out, ref, atol=5e-3, rtol=5e-3), (
        f"mismatch vs reference: max abs err = {jnp.max(jnp.abs(out - ref))}")

    print("KERNEL_OK")
</pallas_src>

<mosaic_0001>
module attributes {stable_mosaic.version = 11 : i64} {
  func.func @encoder_kernel(%arg0: i32, %arg1: memref<16x32xf32, #tpu.memory_space<vmem>>, %arg2: memref<16x32xf32, #tpu.memory_space<vmem>>, %arg3: memref<2x208x128xf32, #tpu.memory_space<vmem>>, %arg4: memref<16x32xf32, #tpu.memory_space<vmem>>) attributes {dimension_semantics = [#tpu.dimension_semantics<arbitrary>], iteration_bounds = array<i64: 1>, scalar_prefetch = 0 : i64, scratch_operands = 0 : i64, tpu.core_type = #tpu.core_type<tc>, window_params = [{pipeline_mode = #tpu.pipeline_mode<synchronous>, transform_indices = @transform_0, window_bounds = array<i64: 16, 32>}, {pipeline_mode = #tpu.pipeline_mode<synchronous>, transform_indices = @transform_1, window_bounds = array<i64: 16, 32>}, {pipeline_mode = #tpu.pipeline_mode<synchronous>, transform_indices = @transform_2, window_bounds = array<i64: 2, 208, 128>}, {pipeline_mode = #tpu.pipeline_mode<synchronous>, transform_indices = @transform_3, window_bounds = array<i64: 16, 32>}]} {
    %c0 = arith.constant 0 : index
    %c0_0 = arith.constant 0 : index
    %0 = vector.load %arg1[%c0, %c0_0] : memref<16x32xf32, #tpu.memory_space<vmem>>, vector<16x32xf32>
    %c0_1 = arith.constant 0 : index
    %c0_2 = arith.constant 0 : index
    %1 = vector.load %arg2[%c0_1, %c0_2] : memref<16x32xf32, #tpu.memory_space<vmem>>, vector<16x32xf32>
    %2 = tpu.iota {dimensions = array<i32: 0>} : vector<16x16xi32>
    %c2_i32 = arith.constant 2 : i32
    %c0_i32 = arith.constant 0 : i32
    %3 = arith.cmpi eq, %c2_i32, %c0_i32 : i32
    %c1_i32 = arith.constant 1 : i32
    %4 = arith.select %3, %c1_i32, %c2_i32 : i32
    %5 = vector.broadcast %4 : i32 to vector<16x16xi32>
    %6 = arith.remsi %2, %5 : vector<16x16xi32>
    %c0_i32_3 = arith.constant 0 : i32
    %7 = vector.broadcast %c0_i32_3 : i32 to vector<16x16xi32>
    %8 = arith.cmpi ne, %6, %7 : vector<16x16xi32>
    %c0_i32_4 = arith.constant 0 : i32
    %9 = vector.broadcast %c0_i32_4 : i32 to vector<16x16xi32>
    %10 = arith.cmpi slt, %6, %9 : vector<16x16xi32>
    %c0_i32_5 = arith.constant 0 : i32
    %11 = arith.cmpi slt, %4, %c0_i32_5 : i32
    %12 = vector.broadcast %11 : i1 to vector<16x16xi1>
    %13 = vector.broadcast %12 : vector<16x16xi1> to vector<16x16xi1>
    %14 = arith.xori %10, %13 : vector<16x16xi1>
    %15 = arith.andi %14, %8 : vector<16x16xi1>
    %16 = vector.broadcast %4 : i32 to vector<16x16xi32>
    %17 = arith.addi %6, %16 : vector<16x16xi32>
    %18 = arith.select %15, %17, %6 : vector<16x16xi1>, vector<16x16xi32>
    %19 = tpu.iota {dimensions = array<i32: 1>} : vector<16x16xi32>
    %c2_i32_6 = arith.constant 2 : i32
    %c0_i32_7 = arith.constant 0 : i32
    %20 = arith.cmpi eq, %c2_i32_6, %c0_i32_7 : i32
    %c1_i32_8 = arith.constant 1 : i32
    %21 = arith.select %20, %c1_i32_8, %c2_i32_6 : i32
    %22 = vector.broadcast %21 : i32 to vector<16x16xi32>
    %23 = arith.remsi %19, %22 : vector<16x16xi32>
    %c0_i32_9 = arith.constant 0 : i32
    %24 = vector.broadcast %c0_i32_9 : i32 to vector<16x16xi32>
    %25 = arith.cmpi ne, %23, %24 : vector<16x16xi32>
    %c0_i32_10 = arith.constant 0 : i32
    %26 = vector.broadcast %c0_i32_10 : i32 to vector<16x16xi32>
    %27 = arith.cmpi slt, %23, %26 : vector<16x16xi32>
    %c0_i32_11 = arith.constant 0 : i32
    %28 = arith.cmpi slt, %21, %c0_i32_11 : i32
    %29 = vector.broadcast %28 : i1 to vector<16x16xi1>
    %30 = vector.broadcast %29 : vector<16x16xi1> to vector<16x16xi1>
    %31 = arith.xori %27, %30 : vector<16x16xi1>
    %32 = arith.andi %31, %25 : vector<16x16xi1>
    %33 = vector.broadcast %21 : i32 to vector<16x16xi32>
    %34 = arith.addi %23, %33 : vector<16x16xi32>
    %35 = arith.select %32, %34, %23 : vector<16x16xi1>, vector<16x16xi32>
    %36 = arith.cmpi eq, %18, %35 : vector<16x16xi32>
    %cst = arith.constant 0.000000e+00 : f32
    %cst_12 = arith.constant -1.000000e+30 : f32
    %37 = vector.broadcast %cst : f32 to vector<16x16xf32>
    %38 = vector.broadcast %cst_12 : f32 to vector<16x16xf32>
    %39 = arith.select %36, %37, %38 : vector<16x16xi1>, vector<16x16xf32>
    %c0_13 = arith.constant 0 : index
    %c0_14 = arith.constant 0 : index
    %c0_15 = arith.constant 0 : index
    %40 = vector.load %arg3[%c0_13, %c0_14, %c0_15] : memref<2x208x128xf32, #tpu.memory_space<vmem>>, vector<1x32x64xf32>
    %41 = vector.shape_cast %40 : vector<1x32x64xf32> to vector<32x64xf32>
    %c0_16 = arith.constant 0 : index
    %c32 = arith.constant 32 : index
    %c0_17 = arith.constant 0 : index
    %42 = vector.load %arg3[%c0_16, %c32, %c0_17] : memref<2x208x128xf32, #tpu.memory_space<vmem>>, vector<1x32x32xf32>
    %43 = vector.shape_cast %42 : vector<1x32x32xf32> to vector<32x32xf32>
    %c0_18 = arith.constant 0 : index
    %c96 = arith.constant 96 : index
    %c0_19 = arith.constant 0 : index
    %44 = vector.load %arg3[%c0_18, %c96, %c0_19] : memref<2x208x128xf32, #tpu.memory_space<vmem>>, vector<1x32x64xf32>
    %45 = vector.shape_cast %44 : vector<1x32x64xf32> to vector<32x64xf32>
    %c0_20 = arith.constant 0 : index
    %c128 = arith.constant 128 : index
    %c0_21 = arith.constant 0 : index
    %46 = vector.load %arg3[%c0_20, %c128, %c0_21] : memref<2x208x128xf32, #tpu.memory_space<vmem>>, vector<1x64x32xf32>
    %47 = vector.shape_cast %46 : vector<1x64x32xf32> to vector<64x32xf32>
    %c0_22 = arith.constant 0 : index
    %c192 = arith.constant 192 : index
    %c0_23 = arith.constant 0 : index
    %48 = vector.load %arg3[%c0_22, %c192, %c0_23] : memref<2x208x128xf32, #tpu.memory_space<vmem>>, vector<1x1x64xf32>
    %49 = vector.shape_cast %48 : vector<1x1x64xf32> to vector<1x64xf32>
    %c0_24 = arith.constant 0 : index
    %c193 = arith.constant 193 : index
    %c0_25 = arith.constant 0 : index
    %50 = vector.load %arg3[%c0_24, %c193, %c0_25] : memref<2x208x128xf32, #tpu.memory_space<vmem>>, vector<1x1x32xf32>
    %51 = vector.shape_cast %50 : vector<1x1x32xf32> to vector<1x32xf32>
    %c0_26 = arith.constant 0 : index
    %c194 = arith.constant 194 : index
    %c0_27 = arith.constant 0 : index
    %52 = vector.load %arg3[%c0_26, %c194, %c0_27] : memref<2x208x128xf32, #tpu.memory_space<vmem>>, vector<1x1x32xf32>
    %53 = vector.shape_cast %52 : vector<1x1x32xf32> to vector<1x32xf32>
    %c0_28 = arith.constant 0 : index
    %c195 = arith.constant 195 : index
    %c0_29 = arith.constant 0 : index
    %54 = vector.load %arg3[%c0_28, %c195, %c0_29] : memref<2x208x128xf32, #tpu.memory_space<vmem>>, vector<1x1x64xf32>
    %55 = vector.shape_cast %54 : vector<1x1x64xf32> to vector<1x64xf32>
    %c0_30 = arith.constant 0 : index
    %c196 = arith.constant 196 : index
    %c0_31 = arith.constant 0 : index
    %56 = vector.load %arg3[%c0_30, %c196, %c0_31] : memref<2x208x128xf32, #tpu.memory_space<vmem>>, vector<1x1x32xf32>
    %57 = vector.shape_cast %56 : vector<1x1x32xf32> to vector<1x32xf32>
    %c0_32 = arith.constant 0 : index
    %c197 = arith.constant 197 : index
    %c0_33 = arith.constant 0 : index
    %58 = vector.load %arg3[%c0_32, %c197, %c0_33] : memref<2x208x128xf32, #tpu.memory_space<vmem>>, vector<1x1x32xf32>
    %59 = vector.shape_cast %58 : vector<1x1x32xf32> to vector<1x32xf32>
    %c0_34 = arith.constant 0 : index
    %c198 = arith.constant 198 : index
    %c0_35 = arith.constant 0 : index
    %60 = vector.load %arg3[%c0_34, %c198, %c0_35] : memref<2x208x128xf32, #tpu.memory_space<vmem>>, vector<1x1x32xf32>
    %61 = vector.shape_cast %60 : vector<1x1x32xf32> to vector<1x32xf32>
    %c0_36 = arith.constant 0 : index
    %c199 = arith.constant 199 : index
    %c0_37 = arith.constant 0 : index
    %62 = vector.load %arg3[%c0_36, %c199, %c0_37] : memref<2x208x128xf32, #tpu.memory_space<vmem>>, vector<1x1x32xf32>
    %63 = vector.shape_cast %62 : vector<1x1x32xf32> to vector<1x32xf32>
    %c0_38 = arith.constant 0 : index
    %c200 = arith.constant 200 : index
    %c0_39 = arith.constant 0 : index
    %64 = vector.load %arg3[%c0_38, %c200, %c0_39] : memref<2x208x128xf32, #tpu.memory_space<vmem>>, vector<1x1x32xf32>
    %65 = vector.shape_cast %64 : vector<1x1x32xf32> to vector<1x32xf32>
    %66 = arith.addf %0, %1 : vector<16x32xf32>
    %cst_40 = arith.constant dense<0.000000e+00> : vector<16x64xf32>
    %67 = tpu.matmul %66, %41, %cst_40 {dimension_numbers = #tpu.dot_dimension_numbers<[1], [0], [0], [1], [0, 0, 1, 1], [], []>} : vector<16x32xf32>, vector<32x64xf32>, vector<16x64xf32> -> vector<16x64xf32>
    %68 = vector.broadcast %49 : vector<1x64xf32> to vector<16x64xf32>
    %69 = arith.addf %67, %68 : vector<16x64xf32>
    %cst_41 = arith.constant dense<0.000000e+00> : vector<16x32xf32>
    %70 = tpu.matmul %0, %43, %cst_41 {dimension_numbers = #tpu.dot_dimension_numbers<[1], [0], [0], [1], [0, 0, 1, 1], [], []>} : vector<16x32xf32>, vector<32x32xf32>, vector<16x32xf32> -> vector<16x32xf32>
    %71 = vector.broadcast %51 : vector<1x32xf32> to vector<16x32xf32>
    %72 = arith.addf %70, %71 : vector<16x32xf32>
    %cst_42 = arith.constant 0.000000e+00 : f32
    %73 = vector.broadcast %cst_42 : f32 to vector<16x32xf32>
    %74 = vector.extract_strided_slice %69 {offsets = [0, 0], sizes = [16, 8], strides = [1, 1]} : vector<16x64xf32> to vector<16x8xf32>
    %75 = vector.extract_strided_slice %69 {offsets = [0, 32], sizes = [16, 8], strides = [1, 1]} : vector<16x64xf32> to vector<16x8xf32>
    %76 = vector.extract_strided_slice %72 {offsets = [0, 0], sizes = [16, 8], strides = [1, 1]} : vector<16x32xf32> to vector<16x8xf32>
    "tpu.trace_start"() <{level = 10 : i32, message = "nd,md->nm"}> : () -> ()
    %cst_43 = arith.constant dense<0.000000e+00> : vector<16x16xf32>
    %77 = tpu.matmul %74, %75, %cst_43 {dimension_numbers = #tpu.dot_dimension_numbers<[1], [1], [0], [0], [0, 0, 1, 0], [], []>} : vector<16x8xf32>, vector<16x8xf32>, vector<16x16xf32> -> vector<16x16xf32>
    "tpu.trace_stop"() : () -> ()
    %78 = arith.addf %77, %39 : vector<16x16xf32>
    %cst_44 = arith.constant dense<0xFF800000> : vector<16xf32>
    %79 = vector.multi_reduction <maximumf>, %78, %cst_44 [1] : vector<16x16xf32> to vector<16xf32>
    %80 = vector.shape_cast %79 : vector<16xf32> to vector<16x1xf32>
    %81 = vector.broadcast %80 : vector<16x1xf32> to vector<16x16xf32>
    %82 = arith.subf %78, %81 : vector<16x16xf32>
    %83 = math.exp %82 : vector<16x16xf32>
    %cst_45 = arith.constant dense<0.000000e+00> : vector<16xf32>
    %84 = vector.multi_reduction <add>, %83, %cst_45 [1] : vector<16x16xf32> to vector<16xf32>
    %85 = vector.shape_cast %84 : vector<16xf32> to vector<16x1xf32>
    %86 = tpu.reciprocal %85 {approx = true} : vector<16x1xf32> -> vector<16x1xf32>
    %87 = vector.broadcast %86 : vector<16x1xf32> to vector<16x16xf32>
    %88 = arith.mulf %83, %87 : vector<16x16xf32>
    %cst_46 = arith.constant dense<0.000000e+00> : vector<16x8xf32>
    %89 = tpu.matmul %88, %76, %cst_46 {dimension_numbers = #tpu.dot_dimension_numbers<[1], [0], [0], [1], [0, 0, 1, 1], [], []>} : vector<16x16xf32>, vector<16x8xf32>, vector<16x8xf32> -> vector<16x8xf32>
    %c0_47 = arith.constant 0 : index
    %c64 = arith.constant 64 : index
    %c0_48 = arith.constant 0 : index
    %90 = vector.load %arg3[%c0_47, %c64, %c0_48] : memref<2x208x128xf32, #tpu.memory_space<vmem>>, vector<1x8x32xf32>
    %91 = vector.shape_cast %90 : vector<1x8x32xf32> to vector<8x32xf32>
    %cst_49 = arith.constant dense<0.000000e+00> : vector<16x32xf32>
    %92 = tpu.matmul %89, %91, %cst_49 {dimension_numbers = #tpu.dot_dimension_numbers<[1], [0], [0], [1], [0, 0, 1, 1], [], []>} : vector<16x8xf32>, vector<8x32xf32>, vector<16x32xf32> -> vector<16x32xf32>
    %93 = arith.addf %73, %92 : vector<16x32xf32>
    %94 = vector.extract_strided_slice %69 {offsets = [0, 8], sizes = [16, 8], strides = [1, 1]} : vector<16x64xf32> to vector<16x8xf32>
    %95 = vector.extract_strided_slice %69 {offsets = [0, 40], sizes = [16, 8], strides = [1, 1]} : vector<16x64xf32> to vector<16x8xf32>
    %96 = vector.extract_strided_slice %72 {offsets = [0, 8], sizes = [16, 8], strides = [1, 1]} : vector<16x32xf32> to vector<16x8xf32>
    "tpu.trace_start"() <{level = 10 : i32, message = "nd,md->nm"}> : () -> ()
    %cst_50 = arith.constant dense<0.000000e+00> : vector<16x16xf32>
    %97 = tpu.matmul %94, %95, %cst_50 {dimension_numbers = #tpu.dot_dimension_numbers<[1], [1], [0], [0], [0, 0, 1, 0], [], []>} : vector<16x8xf32>, vector<16x8xf32>, vector<16x16xf32> -> vector<16x16xf32>
    "tpu.trace_stop"() : () -> ()
    %98 = arith.addf %97, %39 : vector<16x16xf32>
    %cst_51 = arith.constant dense<0xFF800000> : vector<16xf32>
    %99 = vector.multi_reduction <maximumf>, %98, %cst_51 [1] : vector<16x16xf32> to vector<16xf32>
    %100 = vector.shape_cast %99 : vector<16xf32> to vector<16x1xf32>
    %101 = vector.broadcast %100 : vector<16x1xf32> to vector<16x16xf32>
    %102 = arith.subf %98, %101 : vector<16x16xf32>
    %103 = math.exp %102 : vector<16x16xf32>
    %cst_52 = arith.constant dense<0.000000e+00> : vector<16xf32>
    %104 = vector.multi_reduction <add>, %103, %cst_52 [1] : vector<16x16xf32> to vector<16xf32>
    %105 = vector.shape_cast %104 : vector<16xf32> to vector<16x1xf32>
    %106 = tpu.reciprocal %105 {approx = true} : vector<16x1xf32> -> vector<16x1xf32>
    %107 = vector.broadcast %106 : vector<16x1xf32> to vector<16x16xf32>
    %108 = arith.mulf %103, %107 : vector<16x16xf32>
    %cst_53 = arith.constant dense<0.000000e+00> : vector<16x8xf32>
    %109 = tpu.matmul %108, %96, %cst_53 {dimension_numbers = #tpu.dot_dimension_numbers<[1], [0], [0], [1], [0, 0, 1, 1], [], []>} : vector<16x16xf32>, vector<16x8xf32>, vector<16x8xf32> -> vector<16x8xf32>
    %c0_54 = arith.constant 0 : index
    %c72 = arith.constant 72 : index
    %c0_55 = arith.constant 0 : index
    %110 = vector.load %arg3[%c0_54, %c72, %c0_55] : memref<2x208x128xf32, #tpu.memory_space<vmem>>, vector<1x8x32xf32>
    %111 = vector.shape_cast %110 : vector<1x8x32xf32> to vector<8x32xf32>
    %cst_56 = arith.constant dense<0.000000e+00> : vector<16x32xf32>
    %112 = tpu.matmul %109, %111, %cst_56 {dimension_numbers = #tpu.dot_dimension_numbers<[1], [0], [0], [1], [0, 0, 1, 1], [], []>} : vector<16x8xf32>, vector<8x32xf32>, vector<16x32xf32> -> vector<16x32xf32>
    %113 = arith.addf %93, %112 : vector<16x32xf32>
    %114 = vector.extract_strided_slice %69 {offsets = [0, 16], sizes = [16, 8], strides = [1, 1]} : vector<16x64xf32> to vector<16x8xf32>
    %115 = vector.extract_strided_slice %69 {offsets = [0, 48], sizes = [16, 8], strides = [1, 1]} : vector<16x64xf32> to vector<16x8xf32>
    %116 = vector.extract_strided_slice %72 {offsets = [0, 16], sizes = [16, 8], strides = [1, 1]} : vector<16x32xf32> to vector<16x8xf32>
    "tpu.trace_start"() <{level = 10 : i32, message = "nd,md->nm"}> : () -> ()
    %cst_57 = arith.constant dense<0.000000e+00> : vector<16x16xf32>
    %117 = tpu.matmul %114, %115, %cst_57 {dimension_numbers = #tpu.dot_dimension_numbers<[1], [1], [0], [0], [0, 0, 1, 0], [], []>} : vector<16x8xf32>, vector<16x8xf32>, vector<16x16xf32> -> vector<16x16xf32>
    "tpu.trace_stop"() : () -> ()
    %118 = arith.addf %117, %39 : vector<16x16xf32>
    %cst_58 = arith.constant dense<0xFF800000> : vector<16xf32>
    %119 = vector.multi_reduction <maximumf>, %118, %cst_58 [1] : vector<16x16xf32> to vector<16xf32>
    %120 = vector.shape_cast %119 : vector<16xf32> to vector<16x1xf32>
    %121 = vector.broadcast %120 : vector<16x1xf32> to vector<16x16xf32>
    %122 = arith.subf %118, %121 : vector<16x16xf32>
    %123 = math.exp %122 : vector<16x16xf32>
    %cst_59 = arith.constant dense<0.000000e+00> : vector<16xf32>
    %124 = vector.multi_reduction <add>, %123, %cst_59 [1] : vector<16x16xf32> to vector<16xf32>
    %125 = vector.shape_cast %124 : vector<16xf32> to vector<16x1xf32>
    %126 = tpu.reciprocal %125 {approx = true} : vector<16x1xf32> -> vector<16x1xf32>
    %127 = vector.broadcast %126 : vector<16x1xf32> to vector<16x16xf32>
    %128 = arith.mulf %123, %127 : vector<16x16xf32>
    %cst_60 = arith.constant dense<0.000000e+00> : vector<16x8xf32>
    %129 = tpu.matmul %128, %116, %cst_60 {dimension_numbers = #tpu.dot_dimension_numbers<[1], [0], [0], [1], [0, 0, 1, 1], [], []>} : vector<16x16xf32>, vector<16x8xf32>, vector<16x8xf32> -> vector<16x8xf32>
    %c0_61 = arith.constant 0 : index
    %c80 = arith.constant 80 : index
    %c0_62 = arith.constant 0 : index
    %130 = vector.load %arg3[%c0_61, %c80, %c0_62] : memref<2x208x128xf32, #tpu.memory_space<vmem>>, vector<1x8x32xf32>
    %131 = vector.shape_cast %130 : vector<1x8x32xf32> to vector<8x32xf32>
    %cst_63 = arith.constant dense<0.000000e+00> : vector<16x32xf32>
    %132 = tpu.matmul %129, %131, %cst_63 {dimension_numbers = #tpu.dot_dimension_numbers<[1], [0], [0], [1], [0, 0, 1, 1], [], []>} : vector<16x8xf32>, vector<8x32xf32>, vector<16x32xf32> -> vector<16x32xf32>
    %133 = arith.addf %113, %132 : vector<16x32xf32>
    %134 = vector.extract_strided_slice %69 {offsets = [0, 24], sizes = [16, 8], strides = [1, 1]} : vector<16x64xf32> to vector<16x8xf32>
    %135 = vector.extract_strided_slice %69 {offsets = [0, 56], sizes = [16, 8], strides = [1, 1]} : vector<16x64xf32> to vector<16x8xf32>
    %136 = vector.extract_strided_slice %72 {offsets = [0, 24], sizes = [16, 8], strides = [1, 1]} : vector<16x32xf32> to vector<16x8xf32>
    "tpu.trace_start"() <{level = 10 : i32, message = "nd,md->nm"}> : () -> ()
    %cst_64 = arith.constant dense<0.000000e+00> : vector<16x16xf32>
    %137 = tpu.matmul %134, %135, %cst_64 {dimension_numbers = #tpu.dot_dimension_numbers<[1], [1], [0], [0], [0, 0, 1, 0], [], []>} : vector<16x8xf32>, vector<16x8xf32>, vector<16x16xf32> -> vector<16x16xf32>
    "tpu.trace_stop"() : () -> ()
    %138 = arith.addf %137, %39 : vector<16x16xf32>
    %cst_65 = arith.constant dense<0xFF800000> : vector<16xf32>
    %139 = vector.multi_reduction <maximumf>, %138, %cst_65 [1] : vector<16x16xf32> to vector<16xf32>
    %140 = vector.shape_cast %139 : vector<16xf32> to vector<16x1xf32>
    %141 = vector.broadcast %140 : vector<16x1xf32> to vector<16x16xf32>
    %142 = arith.subf %138, %141 : vector<16x16xf32>
    %143 = math.exp %142 : vector<16x16xf32>
    %cst_66 = arith.constant dense<0.000000e+00> : vector<16xf32>
    %144 = vector.multi_reduction <add>, %143, %cst_66 [1] : vector<16x16xf32> to vector<16xf32>
    %145 = vector.shape_cast %144 : vector<16xf32> to vector<16x1xf32>
    %146 = tpu.reciprocal %145 {approx = true} : vector<16x1xf32> -> vector<16x1xf32>
    %147 = vector.broadcast %146 : vector<16x1xf32> to vector<16x16xf32>
    %148 = arith.mulf %143, %147 : vector<16x16xf32>
    %cst_67 = arith.constant dense<0.000000e+00> : vector<16x8xf32>
    %149 = tpu.matmul %148, %136, %cst_67 {dimension_numbers = #tpu.dot_dimension_numbers<[1], [0], [0], [1], [0, 0, 1, 1], [], []>} : vector<16x16xf32>, vector<16x8xf32>, vector<16x8xf32> -> vector<16x8xf32>
    %c0_68 = arith.constant 0 : index
    %c88 = arith.constant 88 : index
    %c0_69 = arith.constant 0 : index
    %150 = vector.load %arg3[%c0_68, %c88, %c0_69] : memref<2x208x128xf32, #tpu.memory_space<vmem>>, vector<1x8x32xf32>
    %151 = vector.shape_cast %150 : vector<1x8x32xf32> to vector<8x32xf32>
    %cst_70 = arith.constant dense<0.000000e+00> : vector<16x32xf32>
    %152 = tpu.matmul %149, %151, %cst_70 {dimension_numbers = #tpu.dot_dimension_numbers<[1], [0], [0], [1], [0, 0, 1, 1], [], []>} : vector<16x8xf32>, vector<8x32xf32>, vector<16x32xf32> -> vector<16x32xf32>
    %153 = arith.addf %133, %152 : vector<16x32xf32>
    %154 = vector.broadcast %53 : vector<1x32xf32> to vector<16x32xf32>
    %155 = arith.addf %153, %154 : vector<16x32xf32>
    %156 = arith.addf %0, %155 : vector<16x32xf32>
    %cst_71 = arith.constant dense<0.000000e+00> : vector<16xf32>
    %157 = vector.multi_reduction <add>, %156, %cst_71 [1] : vector<16x32xf32> to vector<16xf32>
    %158 = vector.shape_cast %157 : vector<16xf32> to vector<16x1xf32>
    %cst_72 = arith.constant 3.200000e+01 : f32
    %159 = vector.broadcast %cst_72 : f32 to vector<16x1xf32>
    %160 = arith.divf %158, %159 : vector<16x1xf32>
    %161 = vector.broadcast %160 : vector<16x1xf32> to vector<16x32xf32>
    %162 = arith.subf %156, %161 : vector<16x32xf32>
    %163 = arith.mulf %162, %162 : vector<16x32xf32>
    %cst_73 = arith.constant dense<0.000000e+00> : vector<16xf32>
    %164 = vector.multi_reduction <add>, %163, %cst_73 [1] : vector<16x32xf32> to vector<16xf32>
    %165 = vector.shape_cast %164 : vector<16xf32> to vector<16x1xf32>
    %cst_74 = arith.constant 3.200000e+01 : f32
    %166 = vector.broadcast %cst_74 : f32 to vector<16x1xf32>
    %167 = arith.divf %165, %166 : vector<16x1xf32>
    %168 = vector.broadcast %160 : vector<16x1xf32> to vector<16x32xf32>
    %169 = arith.subf %156, %168 : vector<16x32xf32>
    %cst_75 = arith.constant 9.99999974E-6 : f32
    %170 = vector.broadcast %cst_75 : f32 to vector<16x1xf32>
    %171 = arith.addf %167, %170 : vector<16x1xf32>
    %172 = math.rsqrt %171 : vector<16x1xf32>
    %173 = vector.broadcast %172 : vector<16x1xf32> to vector<16x32xf32>
    %174 = arith.mulf %169, %173 : vector<16x32xf32>
    %175 = vector.broadcast %59 : vector<1x32xf32> to vector<16x32xf32>
    %176 = arith.mulf %174, %175 : vector<16x32xf32>
    %177 = vector.broadcast %61 : vector<1x32xf32> to vector<16x32xf32>
    %178 = arith.addf %176, %177 : vector<16x32xf32>
    %cst_76 = arith.constant dense<0.000000e+00> : vector<16x64xf32>
    %179 = tpu.matmul %178, %45, %cst_76 {dimension_numbers = #tpu.dot_dimension_numbers<[1], [0], [0], [1], [0, 0, 1, 1], [], []>} : vector<16x32xf32>, vector<32x64xf32>, vector<16x64xf32> -> vector<16x64xf32>
    %180 = vector.broadcast %55 : vector<1x64xf32> to vector<16x64xf32>
    %181 = arith.addf %179, %180 : vector<16x64xf32>
    %cst_77 = arith.constant 0.000000e+00 : f32
    %182 = vector.broadcast %cst_77 : f32 to vector<16x64xf32>
    %183 = arith.maximumf %181, %182 : vector<16x64xf32>
    %cst_78 = arith.constant dense<0.000000e+00> : vector<16x32xf32>
    %184 = tpu.matmul %183, %47, %cst_78 {dimension_numbers = #tpu.dot_dimension_numbers<[1], [0], [0], [1], [0, 0, 1, 1], [], []>} : vector<16x64xf32>, vector<64x32xf32>, vector<16x32xf32> -> vector<16x32xf32>
    %185 = vector.broadcast %57 : vector<1x32xf32> to vector<16x32xf32>
    %186 = arith.addf %184, %185 : vector<16x32xf32>
    %187 = arith.addf %178, %186 : vector<16x32xf32>
    %cst_79 = arith.constant dense<0.000000e+00> : vector<16xf32>
    %188 = vector.multi_reduction <add>, %187, %cst_79 [1] : vector<16x32xf32> to vector<16xf32>
    %189 = vector.shape_cast %188 : vector<16xf32> to vector<16x1xf32>
    %cst_80 = arith.constant 3.200000e+01 : f32
    %190 = vector.broadcast %cst_80 : f32 to vector<16x1xf32>
    %191 = arith.divf %189, %190 : vector<16x1xf32>
    %192 = vector.broadcast %191 : vector<16x1xf32> to vector<16x32xf32>
    %193 = arith.subf %187, %192 : vector<16x32xf32>
    %194 = arith.mulf %193, %193 : vector<16x32xf32>
    %cst_81 = arith.constant dense<0.000000e+00> : vector<16xf32>
    %195 = vector.multi_reduction <add>, %194, %cst_81 [1] : vector<16x32xf32> to vector<16xf32>
    %196 = vector.shape_cast %195 : vector<16xf32> to vector<16x1xf32>
    %cst_82 = arith.constant 3.200000e+01 : f32
    %197 = vector.broadcast %cst_82 : f32 to vector<16x1xf32>
    %198 = arith.divf %196, %197 : vector<16x1xf32>
    %199 = vector.broadcast %191 : vector<16x1xf32> to vector<16x32xf32>
    %200 = arith.subf %187, %199 : vector<16x32xf32>
    %cst_83 = arith.constant 9.99999974E-6 : f32
    %201 = vector.broadcast %cst_83 : f32 to vector<16x1xf32>
    %202 = arith.addf %198, %201 : vector<16x1xf32>
    %203 = math.rsqrt %202 : vector<16x1xf32>
    %204 = vector.broadcast %203 : vector<16x1xf32> to vector<16x32xf32>
    %205 = arith.mulf %200, %204 : vector<16x32xf32>
    %206 = vector.broadcast %63 : vector<1x32xf32> to vector<16x32xf32>
    %207 = arith.mulf %205, %206 : vector<16x32xf32>
    %208 = vector.broadcast %65 : vector<1x32xf32> to vector<16x32xf32>
    %209 = arith.addf %207, %208 : vector<16x32xf32>
    %c1 = arith.constant 1 : index
    %c0_84 = arith.constant 0 : index
    %c0_85 = arith.constant 0 : index
    %210 = vector.load %arg3[%c1, %c0_84, %c0_85] : memref<2x208x128xf32, #tpu.memory_space<vmem>>, vector<1x32x64xf32>
    %211 = vector.shape_cast %210 : vector<1x32x64xf32> to vector<32x64xf32>
    %c1_86 = arith.constant 1 : index
    %c32_87 = arith.constant 32 : index
    %c0_88 = arith.constant 0 : index
    %212 = vector.load %arg3[%c1_86, %c32_87, %c0_88] : memref<2x208x128xf32, #tpu.memory_space<vmem>>, vector<1x32x32xf32>
    %213 = vector.shape_cast %212 : vector<1x32x32xf32> to vector<32x32xf32>
    %c1_89 = arith.constant 1 : index
    %c96_90 = arith.constant 96 : index
    %c0_91 = arith.constant 0 : index
    %214 = vector.load %arg3[%c1_89, %c96_90, %c0_91] : memref<2x208x128xf32, #tpu.memory_space<vmem>>, vector<1x32x64xf32>
    %215 = vector.shape_cast %214 : vector<1x32x64xf32> to vector<32x64xf32>
    %c1_92 = arith.constant 1 : index
    %c128_93 = arith.constant 128 : index
    %c0_94 = arith.constant 0 : index
    %216 = vector.load %arg3[%c1_92, %c128_93, %c0_94] : memref<2x208x128xf32, #tpu.memory_space<vmem>>, vector<1x64x32xf32>
    %217 = vector.shape_cast %216 : vector<1x64x32xf32> to vector<64x32xf32>
    %c1_95 = arith.constant 1 : index
    %c192_96 = arith.constant 192 : index
    %c0_97 = arith.constant 0 : index
    %218 = vector.load %arg3[%c1_95, %c192_96, %c0_97] : memref<2x208x128xf32, #tpu.memory_space<vmem>>, vector<1x1x64xf32>
    %219 = vector.shape_cast %218 : vector<1x1x64xf32> to vector<1x64xf32>
    %c1_98 = arith.constant 1 : index
    %c193_99 = arith.constant 193 : index
    %c0_100 = arith.constant 0 : index
    %220 = vector.load %arg3[%c1_98, %c193_99, %c0_100] : memref<2x208x128xf32, #tpu.memory_space<vmem>>, vector<1x1x32xf32>
    %221 = vector.shape_cast %220 : vector<1x1x32xf32> to vector<1x32xf32>
    %c1_101 = arith.constant 1 : index
    %c194_102 = arith.constant 194 : index
    %c0_103 = arith.constant 0 : index
    %222 = vector.load %arg3[%c1_101, %c194_102, %c0_103] : memref<2x208x128xf32, #tpu.memory_space<vmem>>, vector<1x1x32xf32>
    %223 = vector.shape_cast %222 : vector<1x1x32xf32> to vector<1x32xf32>
    %c1_104 = arith.constant 1 : index
    %c195_105 = arith.constant 195 : index
    %c0_106 = arith.constant 0 : index
    %224 = vector.load %arg3[%c1_104, %c195_105, %c0_106] : memref<2x208x128xf32, #tpu.memory_space<vmem>>, vector<1x1x64xf32>
    %225 = vector.shape_cast %224 : vector<1x1x64xf32> to vector<1x64xf32>
    %c1_107 = arith.constant 1 : index
    %c196_108 = arith.constant 196 : index
    %c0_109 = arith.constant 0 : index
    %226 = vector.load %arg3[%c1_107, %c196_108, %c0_109] : memref<2x208x128xf32, #tpu.memory_space<vmem>>, vector<1x1x32xf32>
    %227 = vector.shape_cast %226 : vector<1x1x32xf32> to vector<1x32xf32>
    %c1_110 = arith.constant 1 : index
    %c197_111 = arith.constant 197 : index
    %c0_112 = arith.constant 0 : index
    %228 = vector.load %arg3[%c1_110, %c197_111, %c0_112] : memref<2x208x128xf32, #tpu.memory_space<vmem>>, vector<1x1x32xf32>
    %229 = vector.shape_cast %228 : vector<1x1x32xf32> to vector<1x32xf32>
    %c1_113 = arith.constant 1 : index
    %c198_114 = arith.constant 198 : index
    %c0_115 = arith.constant 0 : index
    %230 = vector.load %arg3[%c1_113, %c198_114, %c0_115] : memref<2x208x128xf32, #tpu.memory_space<vmem>>, vector<1x1x32xf32>
    %231 = vector.shape_cast %230 : vector<1x1x32xf32> to vector<1x32xf32>
    %c1_116 = arith.constant 1 : index
    %c199_117 = arith.constant 199 : index
    %c0_118 = arith.constant 0 : index
    %232 = vector.load %arg3[%c1_116, %c199_117, %c0_118] : memref<2x208x128xf32, #tpu.memory_space<vmem>>, vector<1x1x32xf32>
    %233 = vector.shape_cast %232 : vector<1x1x32xf32> to vector<1x32xf32>
    %c1_119 = arith.constant 1 : index
    %c200_120 = arith.constant 200 : index
    %c0_121 = arith.constant 0 : index
    %234 = vector.load %arg3[%c1_119, %c200_120, %c0_121] : memref<2x208x128xf32, #tpu.memory_space<vmem>>, vector<1x1x32xf32>
    %235 = vector.shape_cast %234 : vector<1x1x32xf32> to vector<1x32xf32>
    %236 = arith.addf %209, %1 : vector<16x32xf32>
    %cst_122 = arith.constant dense<0.000000e+00> : vector<16x64xf32>
    %237 = tpu.matmul %236, %211, %cst_122 {dimension_numbers = #tpu.dot_dimension_numbers<[1], [0], [0], [1], [0, 0, 1, 1], [], []>} : vector<16x32xf32>, vector<32x64xf32>, vector<16x64xf32> -> vector<16x64xf32>
    %238 = vector.broadcast %219 : vector<1x64xf32> to vector<16x64xf32>
    %239 = arith.addf %237, %238 : vector<16x64xf32>
    %cst_123 = arith.constant dense<0.000000e+00> : vector<16x32xf32>
    %240 = tpu.matmul %209, %213, %cst_123 {dimension_numbers = #tpu.dot_dimension_numbers<[1], [0], [0], [1], [0, 0, 1, 1], [], []>} : vector<16x32xf32>, vector<32x32xf32>, vector<16x32xf32> -> vector<16x32xf32>
    %241 = vector.broadcast %221 : vector<1x32xf32> to vector<16x32xf32>
    %242 = arith.addf %240, %241 : vector<16x32xf32>
    %cst_124 = arith.constant 0.000000e+00 : f32
    %243 = vector.broadcast %cst_124 : f32 to vector<16x32xf32>
    %244 = vector.extract_strided_slice %239 {offsets = [0, 0], sizes = [16, 8], strides = [1, 1]} : vector<16x64xf32> to vector<16x8xf32>
    %245 = vector.extract_strided_slice %239 {offsets = [0, 32], sizes = [16, 8], strides = [1, 1]} : vector<16x64xf32> to vector<16x8xf32>
    %246 = vector.extract_strided_slice %242 {offsets = [0, 0], sizes = [16, 8], strides = [1, 1]} : vector<16x32xf32> to vector<16x8xf32>
    "tpu.trace_start"() <{level = 10 : i32, message = "nd,md->nm"}> : () -> ()
    %cst_125 = arith.constant dense<0.000000e+00> : vector<16x16xf32>
    %247 = tpu.matmul %244, %245, %cst_125 {dimension_numbers = #tpu.dot_dimension_numbers<[1], [1], [0], [0], [0, 0, 1, 0], [], []>} : vector<16x8xf32>, vector<16x8xf32>, vector<16x16xf32> -> vector<16x16xf32>
    "tpu.trace_stop"() : () -> ()
    %248 = arith.addf %247, %39 : vector<16x16xf32>
    %cst_126 = arith.constant dense<0xFF800000> : vector<16xf32>
    %249 = vector.multi_reduction <maximumf>, %248, %cst_126 [1] : vector<16x16xf32> to vector<16xf32>
    %250 = vector.shape_cast %249 : vector<16xf32> to vector<16x1xf32>
    %251 = vector.broadcast %250 : vector<16x1xf32> to vector<16x16xf32>
    %252 = arith.subf %248, %251 : vector<16x16xf32>
    %253 = math.exp %252 : vector<16x16xf32>
    %cst_127 = arith.constant dense<0.000000e+00> : vector<16xf32>
    %254 = vector.multi_reduction <add>, %253, %cst_127 [1] : vector<16x16xf32> to vector<16xf32>
    %255 = vector.shape_cast %254 : vector<16xf32> to vector<16x1xf32>
    %256 = tpu.reciprocal %255 {approx = true} : vector<16x1xf32> -> vector<16x1xf32>
    %257 = vector.broadcast %256 : vector<16x1xf32> to vector<16x16xf32>
    %258 = arith.mulf %253, %257 : vector<16x16xf32>
    %cst_128 = arith.constant dense<0.000000e+00> : vector<16x8xf32>
    %259 = tpu.matmul %258, %246, %cst_128 {dimension_numbers = #tpu.dot_dimension_numbers<[1], [0], [0], [1], [0, 0, 1, 1], [], []>} : vector<16x16xf32>, vector<16x8xf32>, vector<16x8xf32> -> vector<16x8xf32>
    %c1_129 = arith.constant 1 : index
    %c64_130 = arith.constant 64 : index
    %c0_131 = arith.constant 0 : index
    %260 = vector.load %arg3[%c1_129, %c64_130, %c0_131] : memref<2x208x128xf32, #tpu.memory_space<vmem>>, vector<1x8x32xf32>
    %261 = vector.shape_cast %260 : vector<1x8x32xf32> to vector<8x32xf32>
    %cst_132 = arith.constant dense<0.000000e+00> : vector<16x32xf32>
    %262 = tpu.matmul %259, %261, %cst_132 {dimension_numbers = #tpu.dot_dimension_numbers<[1], [0], [0], [1], [0, 0, 1, 1], [], []>} : vector<16x8xf32>, vector<8x32xf32>, vector<16x32xf32> -> vector<16x32xf32>
    %263 = arith.addf %243, %262 : vector<16x32xf32>
    %264 = vector.extract_strided_slice %239 {offsets = [0, 8], sizes = [16, 8], strides = [1, 1]} : vector<16x64xf32> to vector<16x8xf32>
    %265 = vector.extract_strided_slice %239 {offsets = [0, 40], sizes = [16, 8], strides = [1, 1]} : vector<16x64xf32> to vector<16x8xf32>
    %266 = vector.extract_strided_slice %242 {offsets = [0, 8], sizes = [16, 8], strides = [1, 1]} : vector<16x32xf32> to vector<16x8xf32>
    "tpu.trace_start"() <{level = 10 : i32, message = "nd,md->nm"}> : () -> ()
    %cst_133 = arith.constant dense<0.000000e+00> : vector<16x16xf32>
    %267 = tpu.matmul %264, %265, %cst_133 {dimension_numbers = #tpu.dot_dimension_numbers<[1], [1], [0], [0], [0, 0, 1, 0], [], []>} : vector<16x8xf32>, vector<16x8xf32>, vector<16x16xf32> -> vector<16x16xf32>
    "tpu.trace_stop"() : () -> ()
    %268 = arith.addf %267, %39 : vector<16x16xf32>
    %cst_134 = arith.constant dense<0xFF800000> : vector<16xf32>
    %269 = vector.multi_reduction <maximumf>, %268, %cst_134 [1] : vector<16x16xf32> to vector<16xf32>
    %270 = vector.shape_cast %269 : vector<16xf32> to vector<16x1xf32>
    %271 = vector.broadcast %270 : vector<16x1xf32> to vector<16x16xf32>
    %272 = arith.subf %268, %271 : vector<16x16xf32>
    %273 = math.exp %272 : vector<16x16xf32>
    %cst_135 = arith.constant dense<0.000000e+00> : vector<16xf32>
    %274 = vector.multi_reduction <add>, %273, %cst_135 [1] : vector<16x16xf32> to vector<16xf32>
    %275 = vector.shape_cast %274 : vector<16xf32> to vector<16x1xf32>
    %276 = tpu.reciprocal %275 {approx = true} : vector<16x1xf32> -> vector<16x1xf32>
    %277 = vector.broadcast %276 : vector<16x1xf32> to vector<16x16xf32>
    %278 = arith.mulf %273, %277 : vector<16x16xf32>
    %cst_136 = arith.constant dense<0.000000e+00> : vector<16x8xf32>
    %279 = tpu.matmul %278, %266, %cst_136 {dimension_numbers = #tpu.dot_dimension_numbers<[1], [0], [0], [1], [0, 0, 1, 1], [], []>} : vector<16x16xf32>, vector<16x8xf32>, vector<16x8xf32> -> vector<16x8xf32>
    %c1_137 = arith.constant 1 : index
    %c72_138 = arith.constant 72 : index
    %c0_139 = arith.constant 0 : index
    %280 = vector.load %arg3[%c1_137, %c72_138, %c0_139] : memref<2x208x128xf32, #tpu.memory_space<vmem>>, vector<1x8x32xf32>
    %281 = vector.shape_cast %280 : vector<1x8x32xf32> to vector<8x32xf32>
    %cst_140 = arith.constant dense<0.000000e+00> : vector<16x32xf32>
    %282 = tpu.matmul %279, %281, %cst_140 {dimension_numbers = #tpu.dot_dimension_numbers<[1], [0], [0], [1], [0, 0, 1, 1], [], []>} : vector<16x8xf32>, vector<8x32xf32>, vector<16x32xf32> -> vector<16x32xf32>
    %283 = arith.addf %263, %282 : vector<16x32xf32>
    %284 = vector.extract_strided_slice %239 {offsets = [0, 16], sizes = [16, 8], strides = [1, 1]} : vector<16x64xf32> to vector<16x8xf32>
    %285 = vector.extract_strided_slice %239 {offsets = [0, 48], sizes = [16, 8], strides = [1, 1]} : vector<16x64xf32> to vector<16x8xf32>
    %286 = vector.extract_strided_slice %242 {offsets = [0, 16], sizes = [16, 8], strides = [1, 1]} : vector<16x32xf32> to vector<16x8xf32>
    "tpu.trace_start"() <{level = 10 : i32, message = "nd,md->nm"}> : () -> ()
    %cst_141 = arith.constant dense<0.000000e+00> : vector<16x16xf32>
    %287 = tpu.matmul %284, %285, %cst_141 {dimension_numbers = #tpu.dot_dimension_numbers<[1], [1], [0], [0], [0, 0, 1, 0], [], []>} : vector<16x8xf32>, vector<16x8xf32>, vector<16x16xf32> -> vector<16x16xf32>
    "tpu.trace_stop"() : () -> ()
    %288 = arith.addf %287, %39 : vector<16x16xf32>
    %cst_142 = arith.constant dense<0xFF800000> : vector<16xf32>
    %289 = vector.multi_reduction <maximumf>, %288, %cst_142 [1] : vector<16x16xf32> to vector<16xf32>
    %290 = vector.shape_cast %289 : vector<16xf32> to vector<16x1xf32>
    %291 = vector.broadcast %290 : vector<16x1xf32> to vector<16x16xf32>
    %292 = arith.subf %288, %291 : vector<16x16xf32>
    %293 = math.exp %292 : vector<16x16xf32>
    %cst_143 = arith.constant dense<0.000000e+00> : vector<16xf32>
    %294 = vector.multi_reduction <add>, %293, %cst_143 [1] : vector<16x16xf32> to vector<16xf32>
    %295 = vector.shape_cast %294 : vector<16xf32> to vector<16x1xf32>
    %296 = tpu.reciprocal %295 {approx = true} : vector<16x1xf32> -> vector<16x1xf32>
    %297 = vector.broadcast %296 : vector<16x1xf32> to vector<16x16xf32>
    %298 = arith.mulf %293, %297 : vector<16x16xf32>
    %cst_144 = arith.constant dense<0.000000e+00> : vector<16x8xf32>
    %299 = tpu.matmul %298, %286, %cst_144 {dimension_numbers = #tpu.dot_dimension_numbers<[1], [0], [0], [1], [0, 0, 1, 1], [], []>} : vector<16x16xf32>, vector<16x8xf32>, vector<16x8xf32> -> vector<16x8xf32>
    %c1_145 = arith.constant 1 : index
    %c80_146 = arith.constant 80 : index
    %c0_147 = arith.constant 0 : index
    %300 = vector.load %arg3[%c1_145, %c80_146, %c0_147] : memref<2x208x128xf32, #tpu.memory_space<vmem>>, vector<1x8x32xf32>
    %301 = vector.shape_cast %300 : vector<1x8x32xf32> to vector<8x32xf32>
    %cst_148 = arith.constant dense<0.000000e+00> : vector<16x32xf32>
    %302 = tpu.matmul %299, %301, %cst_148 {dimension_numbers = #tpu.dot_dimension_numbers<[1], [0], [0], [1], [0, 0, 1, 1], [], []>} : vector<16x8xf32>, vector<8x32xf32>, vector<16x32xf32> -> vector<16x32xf32>
    %303 = arith.addf %283, %302 : vector<16x32xf32>
    %304 = vector.extract_strided_slice %239 {offsets = [0, 24], sizes = [16, 8], strides = [1, 1]} : vector<16x64xf32> to vector<16x8xf32>
    %305 = vector.extract_strided_slice %239 {offsets = [0, 56], sizes = [16, 8], strides = [1, 1]} : vector<16x64xf32> to vector<16x8xf32>
    %306 = vector.extract_strided_slice %242 {offsets = [0, 24], sizes = [16, 8], strides = [1, 1]} : vector<16x32xf32> to vector<16x8xf32>
    "tpu.trace_start"() <{level = 10 : i32, message = "nd,md->nm"}> : () -> ()
    %cst_149 = arith.constant dense<0.000000e+00> : vector<16x16xf32>
    %307 = tpu.matmul %304, %305, %cst_149 {dimension_numbers = #tpu.dot_dimension_numbers<[1], [1], [0], [0], [0, 0, 1, 0], [], []>} : vector<16x8xf32>, vector<16x8xf32>, vector<16x16xf32> -> vector<16x16xf32>
    "tpu.trace_stop"() : () -> ()
    %308 = arith.addf %307, %39 : vector<16x16xf32>
    %cst_150 = arith.constant dense<0xFF800000> : vector<16xf32>
    %309 = vector.multi_reduction <maximumf>, %308, %cst_150 [1] : vector<16x16xf32> to vector<16xf32>
    %310 = vector.shape_cast %309 : vector<16xf32> to vector<16x1xf32>
    %311 = vector.broadcast %310 : vector<16x1xf32> to vector<16x16xf32>
    %312 = arith.subf %308, %311 : vector<16x16xf32>
    %313 = math.exp %312 : vector<16x16xf32>
    %cst_151 = arith.constant dense<0.000000e+00> : vector<16xf32>
    %314 = vector.multi_reduction <add>, %313, %cst_151 [1] : vector<16x16xf32> to vector<16xf32>
    %315 = vector.shape_cast %314 : vector<16xf32> to vector<16x1xf32>
    %316 = tpu.reciprocal %315 {approx = true} : vector<16x1xf32> -> vector<16x1xf32>
    %317 = vector.broadcast %316 : vector<16x1xf32> to vector<16x16xf32>
    %318 = arith.mulf %313, %317 : vector<16x16xf32>
    %cst_152 = arith.constant dense<0.000000e+00> : vector<16x8xf32>
    %319 = tpu.matmul %318, %306, %cst_152 {dimension_numbers = #tpu.dot_dimension_numbers<[1], [0], [0], [1], [0, 0, 1, 1], [], []>} : vector<16x16xf32>, vector<16x8xf32>, vector<16x8xf32> -> vector<16x8xf32>
    %c1_153 = arith.constant 1 : index
    %c88_154 = arith.constant 88 : index
    %c0_155 = arith.constant 0 : index
    %320 = vector.load %arg3[%c1_153, %c88_154, %c0_155] : memref<2x208x128xf32, #tpu.memory_space<vmem>>, vector<1x8x32xf32>
    %321 = vector.shape_cast %320 : vector<1x8x32xf32> to vector<8x32xf32>
    %cst_156 = arith.constant dense<0.000000e+00> : vector<16x32xf32>
    %322 = tpu.matmul %319, %321, %cst_156 {dimension_numbers = #tpu.dot_dimension_numbers<[1], [0], [0], [1], [0, 0, 1, 1], [], []>} : vector<16x8xf32>, vector<8x32xf32>, vector<16x32xf32> -> vector<16x32xf32>
    %323 = arith.addf %303, %322 : vector<16x32xf32>
    %324 = vector.broadcast %223 : vector<1x32xf32> to vector<16x32xf32>
    %325 = arith.addf %323, %324 : vector<16x32xf32>
    %326 = arith.addf %209, %325 : vector<16x32xf32>
    %cst_157 = arith.constant dense<0.000000e+00> : vector<16xf32>
    %327 = vector.multi_reduction <add>, %326, %cst_157 [1] : vector<16x32xf32> to vector<16xf32>
    %328 = vector.shape_cast %327 : vector<16xf32> to vector<16x1xf32>
    %cst_158 = arith.constant 3.200000e+01 : f32
    %329 = vector.broadcast %cst_158 : f32 to vector<16x1xf32>
    %330 = arith.divf %328, %329 : vector<16x1xf32>
    %331 = vector.broadcast %330 : vector<16x1xf32> to vector<16x32xf32>
    %332 = arith.subf %326, %331 : vector<16x32xf32>
    %333 = arith.mulf %332, %332 : vector<16x32xf32>
    %cst_159 = arith.constant dense<0.000000e+00> : vector<16xf32>
    %334 = vector.multi_reduction <add>, %333, %cst_159 [1] : vector<16x32xf32> to vector<16xf32>
    %335 = vector.shape_cast %334 : vector<16xf32> to vector<16x1xf32>
    %cst_160 = arith.constant 3.200000e+01 : f32
    %336 = vector.broadcast %cst_160 : f32 to vector<16x1xf32>
    %337 = arith.divf %335, %336 : vector<16x1xf32>
    %338 = vector.broadcast %330 : vector<16x1xf32> to vector<16x32xf32>
    %339 = arith.subf %326, %338 : vector<16x32xf32>
    %cst_161 = arith.constant 9.99999974E-6 : f32
    %340 = vector.broadcast %cst_161 : f32 to vector<16x1xf32>
    %341 = arith.addf %337, %340 : vector<16x1xf32>
    %342 = math.rsqrt %341 : vector<16x1xf32>
    %343 = vector.broadcast %342 : vector<16x1xf32> to vector<16x32xf32>
    %344 = arith.mulf %339, %343 : vector<16x32xf32>
    %345 = vector.broadcast %229 : vector<1x32xf32> to vector<16x32xf32>
    %346 = arith.mulf %344, %345 : vector<16x32xf32>
    %347 = vector.broadcast %231 : vector<1x32xf32> to vector<16x32xf32>
    %348 = arith.addf %346, %347 : vector<16x32xf32>
    %cst_162 = arith.constant dense<0.000000e+00> : vector<16x64xf32>
    %349 = tpu.matmul %348, %215, %cst_162 {dimension_numbers = #tpu.dot_dimension_numbers<[1], [0], [0], [1], [0, 0, 1, 1], [], []>} : vector<16x32xf32>, vector<32x64xf32>, vector<16x64xf32> -> vector<16x64xf32>
    %350 = vector.broadcast %225 : vector<1x64xf32> to vector<16x64xf32>
    %351 = arith.addf %349, %350 : vector<16x64xf32>
    %cst_163 = arith.constant 0.000000e+00 : f32
    %352 = vector.broadcast %cst_163 : f32 to vector<16x64xf32>
    %353 = arith.maximumf %351, %352 : vector<16x64xf32>
    %cst_164 = arith.constant dense<0.000000e+00> : vector<16x32xf32>
    %354 = tpu.matmul %353, %217, %cst_164 {dimension_numbers = #tpu.dot_dimension_numbers<[1], [0], [0], [1], [0, 0, 1, 1], [], []>} : vector<16x64xf32>, vector<64x32xf32>, vector<16x32xf32> -> vector<16x32xf32>
    %355 = vector.broadcast %227 : vector<1x32xf32> to vector<16x32xf32>
    %356 = arith.addf %354, %355 : vector<16x32xf32>
    %357 = arith.addf %348, %356 : vector<16x32xf32>
    %cst_165 = arith.constant dense<0.000000e+00> : vector<16xf32>
    %358 = vector.multi_reduction <add>, %357, %cst_165 [1] : vector<16x32xf32> to vector<16xf32>
    %359 = vector.shape_cast %358 : vector<16xf32> to vector<16x1xf32>
    %cst_166 = arith.constant 3.200000e+01 : f32
    %360 = vector.broadcast %cst_166 : f32 to vector<16x1xf32>
    %361 = arith.divf %359, %360 : vector<16x1xf32>
    %362 = vector.broadcast %361 : vector<16x1xf32> to vector<16x32xf32>
    %363 = arith.subf %357, %362 : vector<16x32xf32>
    %364 = arith.mulf %363, %363 : vector<16x32xf32>
    %cst_167 = arith.constant dense<0.000000e+00> : vector<16xf32>
    %365 = vector.multi_reduction <add>, %364, %cst_167 [1] : vector<16x32xf32> to vector<16xf32>
    %366 = vector.shape_cast %365 : vector<16xf32> to vector<16x1xf32>
    %cst_168 = arith.constant 3.200000e+01 : f32
    %367 = vector.broadcast %cst_168 : f32 to vector<16x1xf32>
    %368 = arith.divf %366, %367 : vector<16x1xf32>
    %369 = vector.broadcast %361 : vector<16x1xf32> to vector<16x32xf32>
    %370 = arith.subf %357, %369 : vector<16x32xf32>
    %cst_169 = arith.constant 9.99999974E-6 : f32
    %371 = vector.broadcast %cst_169 : f32 to vector<16x1xf32>
    %372 = arith.addf %368, %371 : vector<16x1xf32>
    %373 = math.rsqrt %372 : vector<16x1xf32>
    %374 = vector.broadcast %373 : vector<16x1xf32> to vector<16x32xf32>
    %375 = arith.mulf %370, %374 : vector<16x32xf32>
    %376 = vector.broadcast %233 : vector<1x32xf32> to vector<16x32xf32>
    %377 = arith.mulf %375, %376 : vector<16x32xf32>
    %378 = vector.broadcast %235 : vector<1x32xf32> to vector<16x32xf32>
    %379 = arith.addf %377, %378 : vector<16x32xf32>
    %c0_170 = arith.constant 0 : index
    %c0_171 = arith.constant 0 : index
    %380 = vector.load %arg4[%c0_170, %c0_171] : memref<16x32xf32, #tpu.memory_space<vmem>>, vector<16x32xf32>
    tpu.vector_store %arg4[%c0_170, %c0_171], %379 {strides = array<i32>} : memref<16x32xf32, #tpu.memory_space<vmem>>, vector<16x32xf32>,
    return
  }
  func.func @transform_0(%arg0: i32) -> (i32, i32) {
    %c0_i32 = arith.constant 0 : i32
    %c0_i32_0 = arith.constant 0 : i32
    %c0_i32_1 = arith.constant 0 : i32
    return %c0_i32, %c0_i32_0 : i32, i32
  }
  func.func @transform_1(%arg0: i32) -> (i32, i32) {
    %c0_i32 = arith.constant 0 : i32
    %c0_i32_0 = arith.constant 0 : i32
    %c0_i32_1 = arith.constant 0 : i32
    return %c0_i32, %c0_i32_0 : i32, i32
  }
  func.func @transform_2(%arg0: i32) -> (i32, i32, i32) {
    %c0_i32 = arith.constant 0 : i32
    %c0_i32_0 = arith.constant 0 : i32
    %c0_i32_1 = arith.constant 0 : i32
    %c0_i32_2 = arith.constant 0 : i32
    return %c0_i32, %c0_i32_0, %c0_i32_1 : i32, i32, i32
  }
  func.func @transform_3(%arg0: i32) -> (i32, i32) {
    %c0_i32 = arith.constant 0 : i32
    %c0_i32_0 = arith.constant 0 : i32
    %c0_i32_1 = arith.constant 0 : i32
    return %c0_i32, %c0_i32_0 : i32, i32
  }
}

</mosaic_0001>

<llo_original>
// kernel: tpu_custom_call.1
$region0: #{tpu_custom_call.1}
  #allocation0 [shape = 'u32[]', space=smem, size = 0x4, offset = 0x4, fixed_abs, tag = 'smem constant byte address 0x4 - core index']
  #allocation1 [shape = 'u32[72,128]{1,0:T(1,128)}', space=vmem, size = 0x9000, scoped, tag = 'internal scratch']
  %s0 = inlined_call_operand.hbm [shape: f32[16,32], index: 0, kind: input, shape index: {}]
  %s1 = inlined_call_operand.hbm [shape: f32[16,32], index: 1, kind: input, shape index: {}]
  %s2 = inlined_call_operand.hbm [shape: f32[2,208,128], index: 2, kind: input, shape index: {}]
  %s3 = inlined_call_operand.hbm [shape: f32[16,32], index: 3, kind: output, shape index: {}]
  %s4 = sld [smem:[#allocation0]]
  $region34: #{tpu_custom_call.1} parent=0
    _
  %s6 = ssub.s32 1, %s4
  %s7 = scalar_select 0, %s6, %s4
  $region1: #{tpu_custom_call.1} parent=0
    #allocation2 [shape = 'u8[8192]{0}', space=vmem, size = 0x2000, scoped, tag = 'input window, operand 0, single buffered']
    #allocation3 [shape = 's32[1]{0}', space=sflag, size = 0x4, scoped, tag = 'scoped memory for tpu_custom_call.1']
    #allocation4 [shape = 's32[1]{0}', space=sflag, size = 0x4, scoped, tag = 'scoped memory for tpu_custom_call.1']
    #allocation5 [shape = 'u8[8192]{0}', space=vmem, size = 0x2000, scoped, tag = 'input window, operand 1, single buffered']
    #allocation6 [shape = 's32[1]{0}', space=sflag, size = 0x4, scoped, tag = 'scoped memory for tpu_custom_call.1']
    #allocation7 [shape = 'u8[212992]{0}', space=vmem, size = 0x34000, scoped, tag = 'input window, operand 2, single buffered']
    #allocation8 [shape = 'u8[8192]{0}', space=vmem, size = 0x2000, scoped, tag = 'output window, operand 0, single buffered']
    %8 = vsyncpa [#allocation3], 0
    %9 = vsyncpa [#allocation6], 0
    %10 = vsyncpa [#allocation4], 0
    // Predicated region
    $region2: #{tpu_custom_call.1} parent=1 // pred_check
      _
    $region3: #{tpu_custom_call.1} parent=1 // pred_check_branch
      %12 = sbr.rel (0) target = $region5
    $region4: #{tpu_custom_call.1} parent=1 // pred_region
      %14 = vsyncadd [#allocation3], 0
      %s15 = sshll.u32 %s0, 4
      %s16 = int_to_ptr.hbm [resolvable:$true] %s15
      %s17 = sshll.u32 [#allocation2], 4
      %s18 = int_to_ptr.vmem [resolvable:$true] %s17
      %23 = dma.hbm_to_vmem [thread:$0]  %s16, 256, %s18, [#allocation3], 128, 128, 8
    $region5: #{tpu_custom_call.1} parent=1 // pred_fallthru
      _
    // Predicated region
    $region6: #{tpu_custom_call.1} parent=1 // pred_check
      _
    $region7: #{tpu_custom_call.1} parent=1 // pred_check_branch
      %25 = sbr.rel (0) target = $region9
    $region8: #{tpu_custom_call.1} parent=1 // pred_region
      %27 = vsyncadd [#allocation6], 0
      %s28 = sshll.u32 %s1, 4
      %s29 = int_to_ptr.hbm [resolvable:$true] %s28
      %s30 = sshll.u32 [#allocation5], 4
      %s31 = int_to_ptr.vmem [resolvable:$true] %s30
      %36 = dma.hbm_to_vmem [thread:$0]  %s29, 256, %s31, [#allocation6], 128, 128, 8
    $region9: #{tpu_custom_call.1} parent=1 // pred_fallthru
      _
    // Predicated region
    $region10: #{tpu_custom_call.1} parent=1 // pred_check
      _
    $region11: #{tpu_custom_call.1} parent=1 // pred_check_branch
      %38 = sbr.rel (0) target = $region13
    $region12: #{tpu_custom_call.1} parent=1 // pred_region
      %40 = vsyncadd [#allocation6], 0
      %s41 = sshll.u32 %s2, 4
      %s42 = int_to_ptr.hbm [resolvable:$true] %s41
      %s43 = sshll.u32 [#allocation7], 4
      %s44 = int_to_ptr.vmem [resolvable:$true] %s43
      %49 = dma.hbm_to_vmem [thread:$0]  %s42, 6656, %s44, [#allocation6], 128, 128, 8
    $region13: #{tpu_custom_call.1} parent=1 // pred_fallthru
      _
    // Predicated region
    $region14: #{tpu_custom_call.1} parent=1 // pred_check
      _
    $region15: #{tpu_custom_call.1} parent=1 // pred_check_branch
      %51 = sbr.rel (0) target = $region17
    $region16: #{tpu_custom_call.1} parent=1 // pred_region
      %53 = dma.done [#allocation3], 256
    $region17: #{tpu_custom_call.1} parent=1 // pred_fallthru
      _
    // Predicated region
    $region18: #{tpu_custom_call.1} parent=1 // pred_check
      _
    $region19: #{tpu_custom_call.1} parent=1 // pred_check_branch
      %55 = sbr.rel (0) target = $region21
    $region20: #{tpu_custom_call.1} parent=1 // pred_region
      %57 = dma.done [#allocation6], 256
    $region21: #{tpu_custom_call.1} parent=1 // pred_fallthru
      _
    // Predicated region
    $region22: #{tpu_custom_call.1} parent=1 // pred_check
      _
    $region23: #{tpu_custom_call.1} parent=1 // pred_check_branch
      %59 = sbr.rel (0) target = $region25
    $region24: #{tpu_custom_call.1} parent=1 // pred_region
      %61 = dma.done [#allocation6], 6656
    $region25: #{tpu_custom_call.1} parent=1 // pred_fallthru
      _
    %v62 = vld [vmem:[#allocation2] sm:$0xff]
    %v63 = vld [vmem:[#allocation2 + $0x8] sm:$0xff]
    %v64 = vld [vmem:[#allocation5] sm:$0xff]
    %v65 = vld [vmem:[#allocation5 + $0x8] sm:$0xff]
    %v66 = vlaneseq
    %v67 = vshrl.u32 %v66, 7
    %v68 = vadd.s32 %v67, 8
    %vm69 = vcmp.lt.s32.totalorder %v67, 0
    %v70 = vsub.s32 0, %v67
    %v71 = vsel %vm69, %v70, %v67
    %v72 = vshrl.u32 %v71, 1
    %v73 = vand.u32 %v71, 1
    %v74 = vsub.s32 0, %v73
    %v75 = vsel %vm69, %v74, %v73
    %vm76 = vcmp.lt.s32.totalorder %v68, 0
    %v77 = vsub.s32 0, %v68
    %v78 = vsel %vm76, %v77, %v68
    %v79 = vshrl.u32 %v78, 1
    %v80 = vand.u32 %v78, 1
    %v81 = vsub.s32 0, %v80
    %v82 = vsel %vm76, %v81, %v80
    %vm83 = vcmp.ne.s32.totalorder %v75, 0
    %vm84 = vcmp.ne.s32.totalorder %v82, 0
    %vm85 = vcmp.lt.s32.totalorder %v75, 0
    %vm86 = vcmp.lt.s32.totalorder %v82, 0
    %vm87 = vmand %vm85, %vm83
    %vm88 = vmand %vm86, %vm84
    %v89 = vadd.s32 %v75, 2
    %v90 = vadd.s32 %v82, 2
    %v91 = vsel %vm87, %v89, %v75
    %v92 = vsel %vm88, %v90, %v82
    %v93 = vlaneseq
    %v94 = vand.u32 %v93, 127
    %vm95 = vcmp.lt.s32.totalorder %v94, 0
    %v96 = vsub.s32 0, %v94
    %v97 = vsel %vm95, %v96, %v94
    %v98 = vshrl.u32 %v97, 1
    %v99 = vand.u32 %v97, 1
    %v100 = vsub.s32 0, %v99
    %v101 = vsel %vm95, %v100, %v99
    %vm102 = vcmp.ne.s32.totalorder %v101, 0
    %vm103 = vcmp.lt.s32.totalorder %v101, 0
    %vm104 = vmand %vm103, %vm102
    %v105 = vadd.s32 %v101, 2
    %v106 = vsel %vm104, %v105, %v101
    %vm107 = vcmp.eq.s32.totalorder %v91, %v106
    %vm108 = vcmp.eq.s32.totalorder %v92, %v106
    %v109 = vsel %vm107, 0.0, -1e+30
    %v110 = vsel %vm108, 0.0, -1e+30
    %v111 = vld [vmem:[#allocation7] sm:$0xff]
    %v112 = vld [vmem:[#allocation7 + $0x8] sm:$0xff]
    %v113 = vld [vmem:[#allocation7 + $0x10] sm:$0xff]
    %v114 = vld [vmem:[#allocation7 + $0x18] sm:$0xff]
    %v115 = vld [vmem:[#allocation7 + $0x20] sm:$0xff]
    %v116 = vld [vmem:[#allocation7 + $0x28] sm:$0xff]
    %v117 = vld [vmem:[#allocation7 + $0x30] sm:$0xff]
    %v118 = vld [vmem:[#allocation7 + $0x38] sm:$0xff]
    %v119 = vld [vmem:[#allocation7 + $0x60] sm:$0xff]
    %v120 = vld [vmem:[#allocation7 + $0x68] sm:$0xff]
    %v121 = vld [vmem:[#allocation7 + $0x70] sm:$0xff]
    %v122 = vld [vmem:[#allocation7 + $0x78] sm:$0xff]
    %v123 = vld [vmem:[#allocation7 + $0x80] sm:$0xff]
    %v124 = vld [vmem:[#allocation7 + $0x88] sm:$0xff]
    %v125 = vld [vmem:[#allocation7 + $0x90] sm:$0xff]
    %v126 = vld [vmem:[#allocation7 + $0x98] sm:$0xff]
    %v127 = vld [vmem:[#allocation7 + $0xa0] sm:$0xff]
    %v128 = vld [vmem:[#allocation7 + $0xa8] sm:$0xff]
    %v129 = vld [vmem:[#allocation7 + $0xb0] sm:$0xff]
    %v130 = vld [vmem:[#allocation7 + $0xb8] sm:$0xff]
    %v131 = vld [vmem:[#allocation7 + $0xc0] sm:$0x1]
    %v132 = vld [vmem:[#allocation7 + $0xc1] sm:$0x1]
    %v133 = vld [vmem:[#allocation7 + $0xc2] sm:$0x1]
    %v134 = vld [vmem:[#allocation7 + $0xc3] sm:$0x1]
    %v135 = vld [vmem:[#allocation7 + $0xc4] sm:$0x1]
    %v136 = vld [vmem:[#allocation7 + $0xc5] sm:$0x1]
    %v137 = vld [vmem:[#allocation7 + $0xc6] sm:$0x1]
    %v138 = vld [vmem:[#allocation7 + $0xc7] sm:$0x1]
    %v139 = vld [vmem:[#allocation7 + $0xc8] sm:$0x1]
    %v140 = vadd.f32 %v62, %v64
    %v141 = vadd.f32 %v63, %v65
    %v142 = vperm.slane %v131, 0
    %vm143 = vcmask 261120
    %v145 = vsel %vm143, %v140, 0
    %v148 = vsel %vm143, %v141, 0
    %150 = vmatpush.msra.mxu0 0.0
    %151 = vmatpush.msra.mxu0 0.0
    %152 = vmatpush.msra.mxu0 0.0
    %153 = vmatpush.msra.mxu0 0.0
    %154 = vmatpush.msra.mxu0 0.0
    %155 = vmatpush.msra.mxu0 0.0
    %156 = vmatpush.msra.mxu0 0.0
    %157 = vmatpush.msra.mxu0 0.0
    %158 = vmatpush.msra.mxu0 0.0
    %159 = vmatpush.msra.mxu0 0.0
    %160 = vmatpush.msra.mxu0 0.0
    %161 = vmatpush.msra.mxu0 0.0
    %162 = vmatpush.msra.mxu0 %v114
    %163 = vmatpush.msra.mxu0 %v113
    %164 = vmatpush.msra.mxu0 %v112
    %165 = vmatpush.msra.mxu0 %v111
    %166 = vmatmul.f32.gmra.mxu0 %v145
    %v167 = vpop.f32.mrf.mxu0
    %v168 = vadd.f32 %v142, %v167
    %169 = vmatmul.f32.gmra.mxu0 %v148
    %v170 = vpop.f32.mrf.mxu0
    %v171 = vadd.f32 %v142, %v170
    %172 = vdwg.mxu0
    %v173 = vperm.slane %v132, 0
    %v175 = vsel %vm143, %v62, 0
    %v178 = vsel %vm143, %v63, 0
    %180 = vmatpush.msra.mxu0 0.0
    %181 = vmatpush.msra.mxu0 0.0
    %182 = vmatpush.msra.mxu0 0.0
    %183 = vmatpush.msra.mxu0 0.0
    %184 = vmatpush.msra.mxu0 0.0
    %185 = vmatpush.msra.mxu0 0.0
    %186 = vmatpush.msra.mxu0 0.0
    %187 = vmatpush.msra.mxu0 0.0
    %188 = vmatpush.msra.mxu0 0.0
    %189 = vmatpush.msra.mxu0 0.0
    %190 = vmatpush.msra.mxu0 0.0
    %191 = vmatpush.msra.mxu0 0.0
    %192 = vmatpush.msra.mxu0 %v118
    %193 = vmatpush.msra.mxu0 %v117
    %194 = vmatpush.msra.mxu0 %v116
    %195 = vmatpush.msra.mxu0 %v115
    %196 = vmatmul.f32.gmra.mxu0 %v175
    %v197 = vpop.f32.mrf.mxu0
    %v198 = vadd.f32 %v173, %v197
    %199 = vmatmul.f32.gmra.mxu0 %v178
    %v200 = vpop.f32.mrf.mxu0
    %v201 = vadd.f32 %v173, %v200
    %202 = vdwg.mxu0
    %205 = vrot.lane.b32.xlu0 %v168, 96
    %v206 = vpop.permute.xlu0 %205
    %207 = vrot.lane.b32.xlu0 %v171, 96
    %v208 = vpop.permute.xlu0 %207
    %vm209 = vcmask 64512
    %v210 = vsel %vm209, %v168, 0
    %v212 = vsel %vm209, %v171, 0
    %v214 = vsel %vm209, %v206, 0
    %v216 = vsel %vm209, %v208, 0
    %218 = vmatpush.xpose.msra.mxu0 0.0
    %219 = vmatpush.xpose.msra.mxu0 0.0
    %220 = vmatpush.xpose.msra.mxu0 0.0
    %221 = vmatpush.xpose.msra.mxu0 0.0
    %222 = vmatpush.xpose.msra.mxu0 0.0
    %223 = vmatpush.xpose.msra.mxu0 0.0
    %224 = vmatpush.xpose.msra.mxu0 0.0
    %225 = vmatpush.xpose.msra.mxu0 0.0
    %226 = vmatpush.xpose.msra.mxu0 0.0
    %227 = vmatpush.xpose.msra.mxu0 0.0
    %228 = vmatpush.xpose.msra.mxu0 0.0
    %229 = vmatpush.xpose.msra.mxu0 0.0
    %230 = vmatpush.xpose.msra.mxu0 0.0
    %231 = vmatpush.xpose.msra.mxu0 0.0
    %232 = vmatpush.xpose.msra.mxu0 %v216
    %233 = vmatpush.xpose.msra.mxu0 %v214
    %234 = vmatmul.f32.gmra.mxu0 %v210
    %v235 = vpop.f32.mrf.mxu0
    %v236 = vadd.f32 %v109, %v235
    %237 = vmatmul.f32.gmra.mxu0 %v212
    %v238 = vpop.f32.mrf.mxu0
    %v239 = vadd.f32 %v110, %v238
    %240 = vdwg.mxu0
    %vm241 = vcmask 130048
    %v242 = vsel %vm241, %v236, -inf
    %243 = vmax.xlane.f32.xlu0 %v242
    %v244 = vpop.xlane.xlu0 %243
    %v245 = vsel %vm241, %v239, -inf
    %246 = vmax.xlane.f32.xlu0 %v245
    %v247 = vpop.xlane.xlu0 %246
    %v248 = vsub.f32 %v236, %v244
    %v249 = vsub.f32 %v239, %v247
    %v250 = vmul.f32 %v248, 1.442695
    %v251 = vpow.pop %v250
    %v252 = vmul.f32 %v249, 1.442695
    %v253 = vpow.pop %v252
    %v254 = vsel %vm241, %v251, 0.0
    %255 = vadd.xlane.f32.xlu0 %v254
    %v256 = vpop.xlane.xlu0 %255
    %v257 = vsel %vm241, %v253, 0.0
    %258 = vadd.xlane.f32.xlu0 %v257
    %v259 = vpop.xlane.xlu0 %258
    %v260 = vrcp.pop %v256
    %v261 = vrcp.pop %v259
    %v262 = vmul.f32 %v251, %v260
    %v263 = vmul.f32 %v253, %v261
    %v265 = vsel %vm241, %v262, 0
    %v268 = vsel %vm241, %v263, 0
    %270 = vmatpush.msra.mxu0 0.0
    %271 = vmatpush.msra.mxu0 0.0
    %272 = vmatpush.msra.mxu0 0.0
    %273 = vmatpush.msra.mxu0 0.0
    %274 = vmatpush.msra.mxu0 0.0
    %275 = vmatpush.msra.mxu0 0.0
    %276 = vmatpush.msra.mxu0 0.0
    %277 = vmatpush.msra.mxu0 0.0
    %278 = vmatpush.msra.mxu0 0.0
    %279 = vmatpush.msra.mxu0 0.0
    %280 = vmatpush.msra.mxu0 0.0
    %281 = vmatpush.msra.mxu0 0.0
    %282 = vmatpush.msra.mxu0 0.0
    %283 = vmatpush.msra.mxu0 0.0
    %284 = vmatpush.msra.mxu0 %v201
    %285 = vmatpush.msra.mxu0 %v198
    %286 = vmatmul.f32.gmra.mxu0 %v265
    %v287 = vpop.f32.mrf.mxu0
    %v288 = vadd.f32 0.0, %v287
    %289 = vmatmul.f32.gmra.mxu0 %v268
    %v290 = vpop.f32.mrf.mxu0
    %v291 = vadd.f32 0.0, %v290
    %292 = vdwg.mxu0
    %v293 = vld [vmem:[#allocation7 + $0x40] sm:$0xff]
    %294 = vrot.lane.b32.xlu0 %v168, 120
    %v295 = vpop.permute.xlu0 %294
    %296 = vrot.lane.b32.xlu0 %v171, 120
    %v297 = vpop.permute.xlu0 %296
    %298 = vrot.lane.b32.xlu0 %v168, 88
    %v299 = vpop.permute.xlu0 %298
    %300 = vrot.lane.b32.xlu0 %v171, 88
    %v301 = vpop.permute.xlu0 %300
    %v302 = vsel %vm209, %v295, 0
    %v304 = vsel %vm209, %v297, 0
    %v306 = vsel %vm209, %v299, 0
    %v308 = vsel %vm209, %v301, 0
    %310 = vmatpush.xpose.msra.mxu0 0.0
    %311 = vmatpush.xpose.msra.mxu0 0.0
    %312 = vmatpush.xpose.msra.mxu0 0.0
    %313 = vmatpush.xpose.msra.mxu0 0.0
    %314 = vmatpush.xpose.msra.mxu0 0.0
    %315 = vmatpush.xpose.msra.mxu0 0.0
    %316 = vmatpush.xpose.msra.mxu0 0.0
    %317 = vmatpush.xpose.msra.mxu0 0.0
    %318 = vmatpush.xpose.msra.mxu0 0.0
    %319 = vmatpush.xpose.msra.mxu0 0.0
    %320 = vmatpush.xpose.msra.mxu0 0.0
    %321 = vmatpush.xpose.msra.mxu0 0.0
    %322 = vmatpush.xpose.msra.mxu0 0.0
    %323 = vmatpush.xpose.msra.mxu0 0.0
    %324 = vmatpush.xpose.msra.mxu0 %v308
    %325 = vmatpush.xpose.msra.mxu0 %v306
    %326 = vmatmul.f32.gmra.mxu0 %v302
    %v327 = vpop.f32.mrf.mxu0
    %v328 = vadd.f32 %v109, %v327
    %329 = vmatmul.f32.gmra.mxu0 %v304
    %v330 = vpop.f32.mrf.mxu0
    %v331 = vadd.f32 %v110, %v330
    %332 = vdwg.mxu0
    %v333 = vsel %vm241, %v328, -inf
    %334 = vmax.xlane.f32.xlu0 %v333
    %v335 = vpop.xlane.xlu0 %334
    %v336 = vsel %vm241, %v331, -inf
    %337 = vmax.xlane.f32.xlu0 %v336
    %v338 = vpop.xlane.xlu0 %337
    %v339 = vsub.f32 %v328, %v335
    %v340 = vsub.f32 %v331, %v338
    %v341 = vmul.f32 %v339, 1.442695
    %v342 = vpow.pop %v341
    %v343 = vmul.f32 %v340, 1.442695
    %v344 = vpow.pop %v343
    %v345 = vsel %vm241, %v342, 0.0
    %346 = vadd.xlane.f32.xlu0 %v345
    %v347 = vpop.xlane.xlu0 %346
    %v348 = vsel %vm241, %v344, 0.0
    %349 = vadd.xlane.f32.xlu0 %v348
    %v350 = vpop.xlane.xlu0 %349
    %v351 = vrcp.pop %v347
    %v352 = vrcp.pop %v350
    %v353 = vmul.f32 %v342, %v351
    %v354 = vmul.f32 %v344, %v352
    %357 = vrot.lane.b32.xlu0 %v198, 120
    %v358 = vpop.permute.xlu0 %357
    %359 = vrot.lane.b32.xlu0 %v201, 120
    %v360 = vpop.permute.xlu0 %359
    %v364 = vsel %vm241, %v353, 0
    %v367 = vsel %vm241, %v354, 0
    %369 = vmatpush.msra.mxu0 0.0
    %370 = vmatpush.msra.mxu0 0.0
    %371 = vmatpush.msra.mxu0 0.0
    %372 = vmatpush.msra.mxu0 0.0
    %373 = vmatpush.msra.mxu0 0.0
    %374 = vmatpush.msra.mxu0 0.0
    %375 = vmatpush.msra.mxu0 0.0
    %376 = vmatpush.msra.mxu0 0.0
    %377 = vmatpush.msra.mxu0 0.0
    %378 = vmatpush.msra.mxu0 0.0
    %379 = vmatpush.msra.mxu0 0.0
    %380 = vmatpush.msra.mxu0 0.0
    %381 = vmatpush.msra.mxu0 0.0
    %382 = vmatpush.msra.mxu0 0.0
    %383 = vmatpush.msra.mxu0 %v360
    %384 = vmatpush.msra.mxu0 %v358
    %385 = vmatmul.f32.gmra.mxu0 %v364
    %v386 = vpop.f32.mrf.mxu0
    %v387 = vadd.f32 0.0, %v386
    %388 = vmatmul.f32.gmra.mxu0 %v367
    %v389 = vpop.f32.mrf.mxu0
    %v390 = vadd.f32 0.0, %v389
    %391 = vdwg.mxu0
    %v392 = vld [vmem:[#allocation7 + $0x48] sm:$0xff]
    %v394 = vsel %vm209, %v387, 0
    %v397 = vsel %vm209, %v390, 0
    %399 = vmatpush.msra.mxu0 0.0
    %400 = vmatpush.msra.mxu0 0.0
    %401 = vmatpush.msra.mxu0 0.0
    %402 = vmatpush.msra.mxu0 0.0
    %403 = vmatpush.msra.mxu0 0.0
    %404 = vmatpush.msra.mxu0 0.0
    %405 = vmatpush.msra.mxu0 0.0
    %406 = vmatpush.msra.mxu0 0.0
    %407 = vmatpush.msra.mxu0 0.0
    %408 = vmatpush.msra.mxu0 0.0
    %409 = vmatpush.msra.mxu0 0.0
    %410 = vmatpush.msra.mxu0 0.0
    %411 = vmatpush.msra.mxu0 0.0
    %412 = vmatpush.msra.mxu0 0.0
    %413 = vmatpush.msra.mxu0 0.0
    %414 = vmatpush.msra.mxu0 %v392
    %415 = vmatmul.f32.gmra.mxu0 %v394
    %v416 = vpop.f32.mrf.mxu0
    %v417 = vadd.f32 0.0, %v416
    %418 = vmatmul.f32.gmra.mxu0 %v397
    %v419 = vpop.f32.mrf.mxu0
    %v420 = vadd.f32 0.0, %v419
    %421 = vdwg.mxu0
    %v423 = vsel %vm209, %v288, 0
    %v426 = vsel %vm209, %v291, 0
    %428 = vmatpush.msra.mxu0 0.0
    %429 = vmatpush.msra.mxu0 0.0
    %430 = vmatpush.msra.mxu0 0.0
    %431 = vmatpush.msra.mxu0 0.0
    %432 = vmatpush.msra.mxu0 0.0
    %433 = vmatpush.msra.mxu0 0.0
    %434 = vmatpush.msra.mxu0 0.0
    %435 = vmatpush.msra.mxu0 0.0
    %436 = vmatpush.msra.mxu0 0.0
    %437 = vmatpush.msra.mxu0 0.0
    %438 = vmatpush.msra.mxu0 0.0
    %439 = vmatpush.msra.mxu0 0.0
    %440 = vmatpush.msra.mxu0 0.0
    %441 = vmatpush.msra.mxu0 0.0
    %442 = vmatpush.msra.mxu0 0.0
    %443 = vmatpush.msra.mxu0 %v293
    %444 = vmatmul.f32.gmra.mxu0 %v423
    %v445 = vpop.f32.mrf.mxu0
    %v446 = vadd.f32 %v417, %v445
    %447 = vmatmul.f32.gmra.mxu0 %v426
    %v448 = vpop.f32.mrf.mxu0
    %v449 = vadd.f32 %v420, %v448
    %450 = vdwg.mxu0
    %451 = vrot.lane.b32.xlu0 %v168, 112
    %v452 = vpop.permute.xlu0 %451
    %453 = vrot.lane.b32.xlu0 %v171, 112
    %v454 = vpop.permute.xlu0 %453
    %455 = vrot.lane.b32.xlu0 %v168, 80
    %v456 = vpop.permute.xlu0 %455
    %457 = vrot.lane.b32.xlu0 %v171, 80
    %v458 = vpop.permute.xlu0 %457
    %v459 = vsel %vm209, %v452, 0
    %v461 = vsel %vm209, %v454, 0
    %v463 = vsel %vm209, %v456, 0
    %v465 = vsel %vm209, %v458, 0
    %467 = vmatpush.xpose.msra.mxu0 0.0
    %468 = vmatpush.xpose.msra.mxu0 0.0
    %469 = vmatpush.xpose.msra.mxu0 0.0
    %470 = vmatpush.xpose.msra.mxu0 0.0
    %471 = vmatpush.xpose.msra.mxu0 0.0
    %472 = vmatpush.xpose.msra.mxu0 0.0
    %473 = vmatpush.xpose.msra.mxu0 0.0
    %474 = vmatpush.xpose.msra.mxu0 0.0
    %475 = vmatpush.xpose.msra.mxu0 0.0
    %476 = vmatpush.xpose.msra.mxu0 0.0
    %477 = vmatpush.xpose.msra.mxu0 0.0
    %478 = vmatpush.xpose.msra.mxu0 0.0
    %479 = vmatpush.xpose.msra.mxu0 0.0
    %480 = vmatpush.xpose.msra.mxu0 0.0
    %481 = vmatpush.xpose.msra.mxu0 %v465
    %482 = vmatpush.xpose.msra.mxu0 %v463
    %483 = vmatmul.f32.gmra.mxu0 %v459
    %v484 = vpop.f32.mrf.mxu0
    %v485 = vadd.f32 %v109, %v484
    %486 = vmatmul.f32.gmra.mxu0 %v461
    %v487 = vpop.f32.mrf.mxu0
    %v488 = vadd.f32 %v110, %v487
    %489 = vdwg.mxu0
    %v490 = vsel %vm241, %v485, -inf
    %491 = vmax.xlane.f32.xlu0 %v490
    %v492 = vpop.xlane.xlu0 %491
    %v493 = vsel %vm241, %v488, -inf
    %494 = vmax.xlane.f32.xlu0 %v493
    %v495 = vpop.xlane.xlu0 %494
    %v496 = vsub.f32 %v485, %v492
    %v497 = vsub.f32 %v488, %v495
    %v498 = vmul.f32 %v496, 1.442695
    %v499 = vpow.pop %v498
    %v500 = vmul.f32 %v497, 1.442695
    %v501 = vpow.pop %v500
    %v502 = vsel %vm241, %v499, 0.0
    %503 = vadd.xlane.f32.xlu0 %v502
    %v504 = vpop.xlane.xlu0 %503
    %v505 = vsel %vm241, %v501, 0.0
    %506 = vadd.xlane.f32.xlu0 %v505
    %v507 = vpop.xlane.xlu0 %506
    %v508 = vrcp.pop %v504
    %v509 = vrcp.pop %v507
    %v510 = vmul.f32 %v499, %v508
    %v511 = vmul.f32 %v501, %v509
    %512 = vrot.lane.b32.xlu0 %v198, 112
    %v513 = vpop.permute.xlu0 %512
    %514 = vrot.lane.b32.xlu0 %v201, 112
    %v515 = vpop.permute.xlu0 %514
    %v519 = vsel %vm241, %v510, 0
    %v522 = vsel %vm241, %v511, 0
    %524 = vmatpush.msra.mxu0 0.0
    %525 = vmatpush.msra.mxu0 0.0
    %526 = vmatpush.msra.mxu0 0.0
    %527 = vmatpush.msra.mxu0 0.0
    %528 = vmatpush.msra.mxu0 0.0
    %529 = vmatpush.msra.mxu0 0.0
    %530 = vmatpush.msra.mxu0 0.0
    %531 = vmatpush.msra.mxu0 0.0
    %532 = vmatpush.msra.mxu0 0.0
    %533 = vmatpush.msra.mxu0 0.0
    %534 = vmatpush.msra.mxu0 0.0
    %535 = vmatpush.msra.mxu0 0.0
    %536 = vmatpush.msra.mxu0 0.0
    %537 = vmatpush.msra.mxu0 0.0
    %538 = vmatpush.msra.mxu0 %v515
    %539 = vmatpush.msra.mxu0 %v513
    %540 = vmatmul.f32.gmra.mxu0 %v519
    %v541 = vpop.f32.mrf.mxu0
    %v542 = vadd.f32 0.0, %v541
    %543 = vmatmul.f32.gmra.mxu0 %v522
    %v544 = vpop.f32.mrf.mxu0
    %v545 = vadd.f32 0.0, %v544
    %546 = vdwg.mxu0
    %v547 = vld [vmem:[#allocation7 + $0x50] sm:$0xff]
    %v549 = vsel %vm209, %v542, 0
    %v552 = vsel %vm209, %v545, 0
    %554 = vmatpush.msra.mxu0 0.0
    %555 = vmatpush.msra.mxu0 0.0
    %556 = vmatpush.msra.mxu0 0.0
    %557 = vmatpush.msra.mxu0 0.0
    %558 = vmatpush.msra.mxu0 0.0
    %559 = vmatpush.msra.mxu0 0.0
    %560 = vmatpush.msra.mxu0 0.0
    %561 = vmatpush.msra.mxu0 0.0
    %562 = vmatpush.msra.mxu0 0.0
    %563 = vmatpush.msra.mxu0 0.0
    %564 = vmatpush.msra.mxu0 0.0
    %565 = vmatpush.msra.mxu0 0.0
    %566 = vmatpush.msra.mxu0 0.0
    %567 = vmatpush.msra.mxu0 0.0
    %568 = vmatpush.msra.mxu0 0.0
    %569 = vmatpush.msra.mxu0 %v547
    %570 = vmatmul.f32.gmra.mxu0 %v549
    %v571 = vpop.f32.mrf.mxu0
    %v572 = vadd.f32 0.0, %v571
    %573 = vmatmul.f32.gmra.mxu0 %v552
    %v574 = vpop.f32.mrf.mxu0
    %v575 = vadd.f32 0.0, %v574
    %576 = vdwg.mxu0
    %v577 = vadd.f32 %v446, %v572
    %v578 = vadd.f32 %v449, %v575
    %579 = vrot.lane.b32.xlu0 %v168, 104
    %v580 = vpop.permute.xlu0 %579
    %581 = vrot.lane.b32.xlu0 %v171, 104
    %v582 = vpop.permute.xlu0 %581
    %583 = vrot.lane.b32.xlu0 %v168, 72
    %v584 = vpop.permute.xlu0 %583
    %585 = vrot.lane.b32.xlu0 %v171, 72
    %v586 = vpop.permute.xlu0 %585
    %v587 = vsel %vm209, %v580, 0
    %v589 = vsel %vm209, %v582, 0
    %v591 = vsel %vm209, %v584, 0
    %v593 = vsel %vm209, %v586, 0
    %595 = vmatpush.xpose.msra.mxu0 0.0
    %596 = vmatpush.xpose.msra.mxu0 0.0
    %597 = vmatpush.xpose.msra.mxu0 0.0
    %598 = vmatpush.xpose.msra.mxu0 0.0
    %599 = vmatpush.xpose.msra.mxu0 0.0
    %600 = vmatpush.xpose.msra.mxu0 0.0
    %601 = vmatpush.xpose.msra.mxu0 0.0
    %602 = vmatpush.xpose.msra.mxu0 0.0
    %603 = vmatpush.xpose.msra.mxu0 0.0
    %604 = vmatpush.xpose.msra.mxu0 0.0
    %605 = vmatpush.xpose.msra.mxu0 0.0
    %606 = vmatpush.xpose.msra.mxu0 0.0
    %607 = vmatpush.xpose.msra.mxu0 0.0
    %608 = vmatpush.xpose.msra.mxu0 0.0
    %609 = vmatpush.xpose.msra.mxu0 %v593
    %610 = vmatpush.xpose.msra.mxu0 %v591
    %611 = vmatmul.f32.gmra.mxu0 %v587
    %v612 = vpop.f32.mrf.mxu0
    %v613 = vadd.f32 %v109, %v612
    %614 = vmatmul.f32.gmra.mxu0 %v589
    %v615 = vpop.f32.mrf.mxu0
    %v616 = vadd.f32 %v110, %v615
    %617 = vdwg.mxu0
    %v618 = vsel %vm241, %v613, -inf
    %619 = vmax.xlane.f32.xlu0 %v618
    %v620 = vpop.xlane.xlu0 %619
    %v621 = vsel %vm241, %v616, -inf
    %622 = vmax.xlane.f32.xlu0 %v621
    %v623 = vpop.xlane.xlu0 %622
    %v624 = vsub.f32 %v613, %v620
    %v625 = vsub.f32 %v616, %v623
    %v626 = vmul.f32 %v624, 1.442695
    %v627 = vpow.pop %v626
    %v628 = vmul.f32 %v625, 1.442695
    %v629 = vpow.pop %v628
    %v630 = vsel %vm241, %v627, 0.0
    %631 = vadd.xlane.f32.xlu0 %v630
    %v632 = vpop.xlane.xlu0 %631
    %v633 = vsel %vm241, %v629, 0.0
    %634 = vadd.xlane.f32.xlu0 %v633
    %v635 = vpop.xlane.xlu0 %634
    %v636 = vrcp.pop %v632
    %v637 = vrcp.pop %v635
    %v638 = vmul.f32 %v627, %v636
    %v639 = vmul.f32 %v629, %v637
    %640 = vrot.lane.b32.xlu0 %v198, 104
    %v641 = vpop.permute.xlu0 %640
    %642 = vrot.lane.b32.xlu0 %v201, 104
    %v643 = vpop.permute.xlu0 %642
    %v647 = vsel %vm241, %v638, 0
    %v650 = vsel %vm241, %v639, 0
    %652 = vmatpush.msra.mxu0 0.0
    %653 = vmatpush.msra.mxu0 0.0
    %654 = vmatpush.msra.mxu0 0.0
    %655 = vmatpush.msra.mxu0 0.0
    %656 = vmatpush.msra.mxu0 0.0
    %657 = vmatpush.msra.mxu0 0.0
    %658 = vmatpush.msra.mxu0 0.0
    %659 = vmatpush.msra.mxu0 0.0
    %660 = vmatpush.msra.mxu0 0.0
    %661 = vmatpush.msra.mxu0 0.0
    %662 = vmatpush.msra.mxu0 0.0
    %663 = vmatpush.msra.mxu0 0.0
    %664 = vmatpush.msra.mxu0 0.0
    %665 = vmatpush.msra.mxu0 0.0
    %666 = vmatpush.msra.mxu0 %v643
    %667 = vmatpush.msra.mxu0 %v641
    %668 = vmatmul.f32.gmra.mxu0 %v647
    %v669 = vpop.f32.mrf.mxu0
    %v670 = vadd.f32 0.0, %v669
    %671 = vmatmul.f32.gmra.mxu0 %v650
    %v672 = vpop.f32.mrf.mxu0
    %v673 = vadd.f32 0.0, %v672
    %674 = vdwg.mxu0
    %v675 = vld [vmem:[#allocation7 + $0x58] sm:$0xff]
    %v677 = vsel %vm209, %v670, 0
    %v680 = vsel %vm209, %v673, 0
    %682 = vmatpush.msra.mxu0 0.0
    %683 = vmatpush.msra.mxu0 0.0
    %684 = vmatpush.msra.mxu0 0.0
    %685 = vmatpush.msra.mxu0 0.0
    %686 = vmatpush.msra.mxu0 0.0
    %687 = vmatpush.msra.mxu0 0.0
    %688 = vmatpush.msra.mxu0 0.0
    %689 = vmatpush.msra.mxu0 0.0
    %690 = vmatpush.msra.mxu0 0.0
    %691 = vmatpush.msra.mxu0 0.0
    %692 = vmatpush.msra.mxu0 0.0
    %693 = vmatpush.msra.mxu0 0.0
    %694 = vmatpush.msra.mxu0 0.0
    %695 = vmatpush.msra.mxu0 0.0
    %696 = vmatpush.msra.mxu0 0.0
    %697 = vmatpush.msra.mxu0 %v675
    %698 = vmatmul.f32.gmra.mxu0 %v677
    %v699 = vpop.f32.mrf.mxu0
    %v700 = vadd.f32 0.0, %v699
    %701 = vmatmul.f32.gmra.mxu0 %v680
    %v702 = vpop.f32.mrf.mxu0
    %v703 = vadd.f32 0.0, %v702
    %704 = vdwg.mxu0
    %v705 = vadd.f32 %v577, %v700
    %v706 = vadd.f32 %v578, %v703
    %v707 = vperm.slane %v133, 0
    %v708 = vadd.f32 %v705, %v707
    %v709 = vadd.f32 %v706, %v707
    %v710 = vadd.f32 %v62, %v708
    %v711 = vadd.f32 %v63, %v709
    %v712 = vsel %vm143, %v710, 0.0
    %713 = vadd.xlane.f32.xlu0 %v712
    %v714 = vpop.xlane.xlu0 %713
    %v715 = vsel %vm143, %v711, 0.0
    %716 = vadd.xlane.f32.xlu0 %v715
    %v717 = vpop.xlane.xlu0 %716
    %v718 = vrcp.pop 32.0
    %v719 = vmul.f32 32.0, %v718
    %v720 = vsub.f32 1.0, %v719
    %v721 = vmul.f32 %v718, %v720
    %v722 = vadd.f32 %v718, %v721
    %vm723 = vweird.f32 %v718
    %v724 = vsel %vm723, %v718, %v722
    %v725 = vmul.f32 %v714, %v724
    %v726 = vmul.f32 %v717, %v724
    %v727 = vsub.f32 %v710, %v725
    %v728 = vsub.f32 %v711, %v726
    %v729 = vmul.f32 %v727, %v727
    %v730 = vmul.f32 %v728, %v728
    %v731 = vsel %vm143, %v729, 0.0
    %732 = vadd.xlane.f32.xlu0 %v731
    %v733 = vpop.xlane.xlu0 %732
    %v734 = vsel %vm143, %v730, 0.0
    %735 = vadd.xlane.f32.xlu0 %v734
    %v736 = vpop.xlane.xlu0 %735
    %v737 = vmul.f32 %v733, %v724
    %v738 = vmul.f32 %v736, %v724
    %v739 = vadd.f32 %v737, 1e-05
    %v740 = vadd.f32 %v738, 1e-05
    %v741 = vrsqrt.pop %v739
    %v742 = vmul.f32 %v741, %v739
    %v743 = vmul.f32 %v742, %v741
    %v744 = vmul.f32 0.5, %v743
    %v745 = vsub.f32 1.5, %v744
    %v746 = vmul.f32 %v741, %v745
    %vm747 = vweird.f32 %v739
    %vm748 = vweird.f32 %v741
    %vm749 = vmor %vm747, %vm748
    %v750 = vsel %vm749, %v741, %v746
    %v751 = vrsqrt.pop %v740
    %v752 = vmul.f32 %v751, %v740
    %v753 = vmul.f32 %v752, %v751
    %v754 = vmul.f32 0.5, %v753
    %v755 = vsub.f32 1.5, %v754
    %v756 = vmul.f32 %v751, %v755
    %vm757 = vweird.f32 %v740
    %vm758 = vweird.f32 %v751
    %vm759 = vmor %vm757, %vm758
    %v760 = vsel %vm759, %v751, %v756
    %v761 = vmul.f32 %v727, %v750
    %v762 = vmul.f32 %v728, %v760
    %v763 = vperm.slane %v136, 0
    %v764 = vmul.f32 %v761, %v763
    %v765 = vmul.f32 %v762, %v763
    %v766 = vperm.slane %v137, 0
    %v767 = vadd.f32 %v764, %v766
    %v768 = vadd.f32 %v765, %v766
    %v769 = vperm.slane %v134, 0
    %v771 = vsel %vm143, %v767, 0
    %v774 = vsel %vm143, %v768, 0
    %776 = vmatpush.msra.mxu0 0.0
    %777 = vmatpush.msra.mxu0 0.0
    %778 = vmatpush.msra.mxu0 0.0
    %779 = vmatpush.msra.mxu0 0.0
    %780 = vmatpush.msra.mxu0 0.0
    %781 = vmatpush.msra.mxu0 0.0
    %782 = vmatpush.msra.mxu0 0.0
    %783 = vmatpush.msra.mxu0 0.0
    %784 = vmatpush.msra.mxu0 0.0
    %785 = vmatpush.msra.mxu0 0.0
    %786 = vmatpush.msra.mxu0 0.0
    %787 = vmatpush.msra.mxu0 0.0
    %788 = vmatpush.msra.mxu0 %v122
    %789 = vmatpush.msra.mxu0 %v121
    %790 = vmatpush.msra.mxu0 %v120
    %791 = vmatpush.msra.mxu0 %v119
    %792 = vmatmul.f32.gmra.mxu0 %v771
    %v793 = vpop.f32.mrf.mxu0
    %v794 = vadd.f32 %v769, %v793
    %795 = vmatmul.f32.gmra.mxu0 %v774
    %v796 = vpop.f32.mrf.mxu0
    %v797 = vadd.f32 %v769, %v796
    %798 = vdwg.mxu0
    %v799 = vmax.f32 %v794, 0.0
    %v800 = vmax.f32 %v797, 0.0
    %v801 = vperm.slane %v135, 0
    %vm802 = vcmask 523264
    %v804 = vsel %vm802, %v799, 0
    %v807 = vsel %vm802, %v800, 0
    %809 = vmatpush.msra.mxu0 0.0
    %810 = vmatpush.msra.mxu0 0.0
    %811 = vmatpush.msra.mxu0 0.0
    %812 = vmatpush.msra.mxu0 0.0
    %813 = vmatpush.msra.mxu0 0.0
    %814 = vmatpush.msra.mxu0 0.0
    %815 = vmatpush.msra.mxu0 0.0
    %816 = vmatpush.msra.mxu0 0.0
    %817 = vmatpush.msra.mxu0 %v130
    %818 = vmatpush.msra.mxu0 %v129
    %819 = vmatpush.msra.mxu0 %v128
    %820 = vmatpush.msra.mxu0 %v127
    %821 = vmatpush.msra.mxu0 %v126
    %822 = vmatpush.msra.mxu0 %v125
    %823 = vmatpush.msra.mxu0 %v124
    %824 = vmatpush.msra.mxu0 %v123
    %825 = vmatmul.f32.gmra.mxu0 %v804
    %v826 = vpop.f32.mrf.mxu0
    %v827 = vadd.f32 %v801, %v826
    %828 = vmatmul.f32.gmra.mxu0 %v807
    %v829 = vpop.f32.mrf.mxu0
    %v830 = vadd.f32 %v801, %v829
    %831 = vdwg.mxu0
    %v832 = vadd.f32 %v767, %v827
    %v833 = vadd.f32 %v768, %v830
    %v834 = vsel %vm143, %v832, 0.0
    %835 = vadd.xlane.f32.xlu0 %v834
    %v836 = vpop.xlane.xlu0 %835
    %v837 = vsel %vm143, %v833, 0.0
    %838 = vadd.xlane.f32.xlu0 %v837
    %v839 = vpop.xlane.xlu0 %838
    %v840 = vmul.f32 %v836, %v724
    %v841 = vmul.f32 %v839, %v724
    %v842 = vsub.f32 %v832, %v840
    %v843 = vsub.f32 %v833, %v841
    %v844 = vmul.f32 %v842, %v842
    %v845 = vmul.f32 %v843, %v843
    %v846 = vsel %vm143, %v844, 0.0
    %847 = vadd.xlane.f32.xlu0 %v846
    %v848 = vpop.xlane.xlu0 %847
    %v849 = vsel %vm143, %v845, 0.0
    %850 = vadd.xlane.f32.xlu0 %v849
    %v851 = vpop.xlane.xlu0 %850
    %v852 = vmul.f32 %v848, %v724
    %v853 = vmul.f32 %v851, %v724
    %v854 = vadd.f32 %v852, 1e-05
    %v855 = vadd.f32 %v853, 1e-05
    %v856 = vrsqrt.pop %v854
    %v857 = vmul.f32 %v856, %v854
    %v858 = vmul.f32 %v857, %v856
    %v859 = vmul.f32 0.5, %v858
    %v860 = vsub.f32 1.5, %v859
    %v861 = vmul.f32 %v856, %v860
    %vm862 = vweird.f32 %v854
    %vm863 = vweird.f32 %v856
    %vm864 = vmor %vm862, %vm863
    %v865 = vsel %vm864, %v856, %v861
    %v866 = vrsqrt.pop %v855
    %v867 = vmul.f32 %v866, %v855
    %v868 = vmul.f32 %v867, %v866
    %v869 = vmul.f32 0.5, %v868
    %v870 = vsub.f32 1.5, %v869
    %v871 = vmul.f32 %v866, %v870
    %vm872 = vweird.f32 %v855
    %vm873 = vweird.f32 %v866
    %vm874 = vmor %vm872, %vm873
    %v875 = vsel %vm874, %v866, %v871
    %v876 = vmul.f32 %v842, %v865
    %v877 = vmul.f32 %v843, %v875
    %v878 = vperm.slane %v138, 0
    %v879 = vmul.f32 %v876, %v878
    %v880 = vmul.f32 %v877, %v878
    %v881 = vperm.slane %v139, 0
    %v882 = vadd.f32 %v879, %v881
    %v883 = vadd.f32 %v880, %v881
    %s884 = scalar_lea.vmem [#allocation7], 208
    %v885 = vld [vmem:[%s884] sm:$0xff]
    %v886 = vld [vmem:[%s884 + $0x8] sm:$0xff]
    %v887 = vld [vmem:[%s884 + $0x10] sm:$0xff]
    %v888 = vld [vmem:[%s884 + $0x18] sm:$0xff]
    %v889 = vld [vmem:[%s884 + $0x20] sm:$0xff]
    %v890 = vld [vmem:[%s884 + $0x28] sm:$0xff]
    %v891 = vld [vmem:[%s884 + $0x30] sm:$0xff]
    %v892 = vld [vmem:[%s884 + $0x38] sm:$0xff]
    %v893 = vld [vmem:[%s884 + $0x60] sm:$0xff]
    %v894 = vld [vmem:[%s884 + $0x68] sm:$0xff]
    %v895 = vld [vmem:[%s884 + $0x70] sm:$0xff]
    %v896 = vld [vmem:[%s884 + $0x78] sm:$0xff]
    %v897 = vld [vmem:[%s884 + $0x80] sm:$0xff]
    %v898 = vld [vmem:[%s884 + $0x88] sm:$0xff]
    %v899 = vld [vmem:[%s884 + $0x90] sm:$0xff]
    %v900 = vld [vmem:[%s884 + $0x98] sm:$0xff]
    %v901 = vld [vmem:[%s884 + $0xa0] sm:$0xff]
    %v902 = vld [vmem:[%s884 + $0xa8] sm:$0xff]
    %v903 = vld [vmem:[%s884 + $0xb0] sm:$0xff]
    %v904 = vld [vmem:[%s884 + $0xb8] sm:$0xff]
    %v905 = vld [vmem:[%s884 + $0xc0] sm:$0x1]
    %v906 = vld [vmem:[%s884 + $0xc1] sm:$0x1]
    %v907 = vld [vmem:[%s884 + $0xc2] sm:$0x1]
    %v908 = vld [vmem:[%s884 + $0xc3] sm:$0x1]
    %v909 = vld [vmem:[%s884 + $0xc4] sm:$0x1]
    %v910 = vld [vmem:[%s884 + $0xc5] sm:$0x1]
    %v911 = vld [vmem:[%s884 + $0xc6] sm:$0x1]
    %v912 = vld [vmem:[%s884 + $0xc7] sm:$0x1]
    %v913 = vld [vmem:[%s884 + $0xc8] sm:$0x1]
    %v914 = vadd.f32 %v882, %v64
    %v915 = vadd.f32 %v883, %v65
    %v916 = vperm.slane %v905, 0
    %v918 = vsel %vm143, %v914, 0
    %v921 = vsel %vm143, %v915, 0
    %923 = vmatpush.msra.mxu0 0.0
    %924 = vmatpush.msra.mxu0 0.0
    %925 = vmatpush.msra.mxu0 0.0
    %926 = vmatpush.msra.mxu0 0.0
    %927 = vmatpush.msra.mxu0 0.0
    %928 = vmatpush.msra.mxu0 0.0
    %929 = vmatpush.msra.mxu0 0.0
    %930 = vmatpush.msra.mxu0 0.0
    %931 = vmatpush.msra.mxu0 0.0
    %932 = vmatpush.msra.mxu0 0.0
    %933 = vmatpush.msra.mxu0 0.0
    %934 = vmatpush.msra.mxu0 0.0
    %935 = vmatpush.msra.mxu0 %v888
    %936 = vmatpush.msra.mxu0 %v887
    %937 = vmatpush.msra.mxu0 %v886
    %938 = vmatpush.msra.mxu0 %v885
    %939 = vmatmul.f32.gmra.mxu0 %v918
    %v940 = vpop.f32.mrf.mxu0
    %v941 = vadd.f32 %v916, %v940
    %942 = vmatmul.f32.gmra.mxu0 %v921
    %v943 = vpop.f32.mrf.mxu0
    %v944 = vadd.f32 %v916, %v943
    %945 = vdwg.mxu0
    %v946 = vperm.slane %v906, 0
    %v948 = vsel %vm143, %v882, 0
    %v951 = vsel %vm143, %v883, 0
    %953 = vmatpush.msra.mxu0 0.0
    %954 = vmatpush.msra.mxu0 0.0
    %955 = vmatpush.msra.mxu0 0.0
    %956 = vmatpush.msra.mxu0 0.0
    %957 = vmatpush.msra.mxu0 0.0
    %958 = vmatpush.msra.mxu0 0.0
    %959 = vmatpush.msra.mxu0 0.0
    %960 = vmatpush.msra.mxu0 0.0
    %961 = vmatpush.msra.mxu0 0.0
    %962 = vmatpush.msra.mxu0 0.0
    %963 = vmatpush.msra.mxu0 0.0
    %964 = vmatpush.msra.mxu0 0.0
    %965 = vmatpush.msra.mxu0 %v892
    %966 = vmatpush.msra.mxu0 %v891
    %967 = vmatpush.msra.mxu0 %v890
    %968 = vmatpush.msra.mxu0 %v889
    %969 = vmatmul.f32.gmra.mxu0 %v948
    %v970 = vpop.f32.mrf.mxu0
    %v971 = vadd.f32 %v946, %v970
    %972 = vmatmul.f32.gmra.mxu0 %v951
    %v973 = vpop.f32.mrf.mxu0
    %v974 = vadd.f32 %v946, %v973
    %975 = vdwg.mxu0
    %978 = vrot.lane.b32.xlu0 %v941, 96
    %v979 = vpop.permute.xlu0 %978
    %980 = vrot.lane.b32.xlu0 %v944, 96
    %v981 = vpop.permute.xlu0 %980
    %v982 = vsel %vm209, %v941, 0
    %v984 = vsel %vm209, %v944, 0
    %v986 = vsel %vm209, %v979, 0
    %v988 = vsel %vm209, %v981, 0
    %990 = vmatpush.xpose.msra.mxu0 0.0
    %991 = vmatpush.xpose.msra.mxu0 0.0
    %992 = vmatpush.xpose.msra.mxu0 0.0
    %993 = vmatpush.xpose.msra.mxu0 0.0
    %994 = vmatpush.xpose.msra.mxu0 0.0
    %995 = vmatpush.xpose.msra.mxu0 0.0
    %996 = vmatpush.xpose.msra.mxu0 0.0
    %997 = vmatpush.xpose.msra.mxu0 0.0
    %998 = vmatpush.xpose.msra.mxu0 0.0
    %999 = vmatpush.xpose.msra.mxu0 0.0
    %1000 = vmatpush.xpose.msra.mxu0 0.0
    %1001 = vmatpush.xpose.msra.mxu0 0.0
    %1002 = vmatpush.xpose.msra.mxu0 0.0
    %1003 = vmatpush.xpose.msra.mxu0 0.0
    %1004 = vmatpush.xpose.msra.mxu0 %v988
    %1005 = vmatpush.xpose.msra.mxu0 %v986
    %1006 = vmatmul.f32.gmra.mxu0 %v982
    %v1007 = vpop.f32.mrf.mxu0
    %v1008 = vadd.f32 %v109, %v1007
    %1009 = vmatmul.f32.gmra.mxu0 %v984
    %v1010 = vpop.f32.mrf.mxu0
    %v1011 = vadd.f32 %v110, %v1010
    %1012 = vdwg.mxu0
    %v1013 = vsel %vm241, %v1008, -inf
    %1014 = vmax.xlane.f32.xlu0 %v1013
    %v1015 = vpop.xlane.xlu0 %1014
    %v1016 = vsel %vm241, %v1011, -inf
    %1017 = vmax.xlane.f32.xlu0 %v1016
    %v1018 = vpop.xlane.xlu0 %1017
    %v1019 = vsub.f32 %v1008, %v1015
    %v1020 = vsub.f32 %v1011, %v1018
    %v1021 = vmul.f32 %v1019, 1.442695
    %v1022 = vpow.pop %v1021
    %v1023 = vmul.f32 %v1020, 1.442695
    %v1024 = vpow.pop %v1023
    %v1025 = vsel %vm241, %v1022, 0.0
    %1026 = vadd.xlane.f32.xlu0 %v1025
    %v1027 = vpop.xlane.xlu0 %1026
    %v1028 = vsel %vm241, %v1024, 0.0
    %1029 = vadd.xlane.f32.xlu0 %v1028
    %v1030 = vpop.xlane.xlu0 %1029
    %v1031 = vrcp.pop %v1027
    %v1032 = vrcp.pop %v1030
    %v1033 = vmul.f32 %v1022, %v1031
    %v1034 = vmul.f32 %v1024, %v1032
    %v1036 = vsel %vm241, %v1033, 0
    %v1039 = vsel %vm241, %v1034, 0
    %1041 = vmatpush.msra.mxu0 0.0
    %1042 = vmatpush.msra.mxu0 0.0
    %1043 = vmatpush.msra.mxu0 0.0
    %1044 = vmatpush.msra.mxu0 0.0
    %1045 = vmatpush.msra.mxu0 0.0
    %1046 = vmatpush.msra.mxu0 0.0
    %1047 = vmatpush.msra.mxu0 0.0
    %1048 = vmatpush.msra.mxu0 0.0
    %1049 = vmatpush.msra.mxu0 0.0
    %1050 = vmatpush.msra.mxu0 0.0
    %1051 = vmatpush.msra.mxu0 0.0
    %1052 = vmatpush.msra.mxu0 0.0
    %1053 = vmatpush.msra.mxu0 0.0
    %1054 = vmatpush.msra.mxu0 0.0
    %1055 = vmatpush.msra.mxu0 %v974
    %1056 = vmatpush.msra.mxu0 %v971
    %1057 = vmatmul.f32.gmra.mxu0 %v1036
    %v1058 = vpop.f32.mrf.mxu0
    %v1059 = vadd.f32 0.0, %v1058
    %1060 = vmatmul.f32.gmra.mxu0 %v1039
    %v1061 = vpop.f32.mrf.mxu0
    %v1062 = vadd.f32 0.0, %v1061
    %1063 = vdwg.mxu0
    %v1064 = vld [vmem:[%s884 + $0x40] sm:$0xff]
    %1065 = vrot.lane.b32.xlu0 %v941, 120
    %v1066 = vpop.permute.xlu0 %1065
    %1067 = vrot.lane.b32.xlu0 %v944, 120
    %v1068 = vpop.permute.xlu0 %1067
    %1069 = vrot.lane.b32.xlu0 %v941, 88
    %v1070 = vpop.permute.xlu0 %1069
    %1071 = vrot.lane.b32.xlu0 %v944, 88
    %v1072 = vpop.permute.xlu0 %1071
    %v1073 = vsel %vm209, %v1066, 0
    %v1075 = vsel %vm209, %v1068, 0
    %v1077 = vsel %vm209, %v1070, 0
    %v1079 = vsel %vm209, %v1072, 0
    %1081 = vmatpush.xpose.msra.mxu0 0.0
    %1082 = vmatpush.xpose.msra.mxu0 0.0
    %1083 = vmatpush.xpose.msra.mxu0 0.0
    %1084 = vmatpush.xpose.msra.mxu0 0.0
    %1085 = vmatpush.xpose.msra.mxu0 0.0
    %1086 = vmatpush.xpose.msra.mxu0 0.0
    %1087 = vmatpush.xpose.msra.mxu0 0.0
    %1088 = vmatpush.xpose.msra.mxu0 0.0
    %1089 = vmatpush.xpose.msra.mxu0 0.0
    %1090 = vmatpush.xpose.msra.mxu0 0.0
    %1091 = vmatpush.xpose.msra.mxu0 0.0
    %1092 = vmatpush.xpose.msra.mxu0 0.0
    %1093 = vmatpush.xpose.msra.mxu0 0.0
    %1094 = vmatpush.xpose.msra.mxu0 0.0
    %1095 = vmatpush.xpose.msra.mxu0 %v1079
    %1096 = vmatpush.xpose.msra.mxu0 %v1077
    %1097 = vmatmul.f32.gmra.mxu0 %v1073
    %v1098 = vpop.f32.mrf.mxu0
    %v1099 = vadd.f32 %v109, %v1098
    %1100 = vmatmul.f32.gmra.mxu0 %v1075
    %v1101 = vpop.f32.mrf.mxu0
    %v1102 = vadd.f32 %v110, %v1101
    %1103 = vdwg.mxu0
    %v1104 = vsel %vm241, %v1099, -inf
    %1105 = vmax.xlane.f32.xlu0 %v1104
    %v1106 = vpop.xlane.xlu0 %1105
    %v1107 = vsel %vm241, %v1102, -inf
    %1108 = vmax.xlane.f32.xlu0 %v1107
    %v1109 = vpop.xlane.xlu0 %1108
    %v1110 = vsub.f32 %v1099, %v1106
    %v1111 = vsub.f32 %v1102, %v1109
    %v1112 = vmul.f32 %v1110, 1.442695
    %v1113 = vpow.pop %v1112
    %v1114 = vmul.f32 %v1111, 1.442695
    %v1115 = vpow.pop %v1114
    %v1116 = vsel %vm241, %v1113, 0.0
    %1117 = vadd.xlane.f32.xlu0 %v1116
    %v1118 = vpop.xlane.xlu0 %1117
    %v1119 = vsel %vm241, %v1115, 0.0
    %1120 = vadd.xlane.f32.xlu0 %v1119
    %v1121 = vpop.xlane.xlu0 %1120
    %v1122 = vrcp.pop %v1118
    %v1123 = vrcp.pop %v1121
    %v1124 = vmul.f32 %v1113, %v1122
    %v1125 = vmul.f32 %v1115, %v1123
    %1128 = vrot.lane.b32.xlu0 %v971, 120
    %v1129 = vpop.permute.xlu0 %1128
    %1130 = vrot.lane.b32.xlu0 %v974, 120
    %v1131 = vpop.permute.xlu0 %1130
    %v1135 = vsel %vm241, %v1124, 0
    %v1138 = vsel %vm241, %v1125, 0
    %1140 = vmatpush.msra.mxu0 0.0
    %1141 = vmatpush.msra.mxu0 0.0
    %1142 = vmatpush.msra.mxu0 0.0
    %1143 = vmatpush.msra.mxu0 0.0
    %1144 = vmatpush.msra.mxu0 0.0
    %1145 = vmatpush.msra.mxu0 0.0
    %1146 = vmatpush.msra.mxu0 0.0
    %1147 = vmatpush.msra.mxu0 0.0
    %1148 = vmatpush.msra.mxu0 0.0
    %1149 = vmatpush.msra.mxu0 0.0
    %1150 = vmatpush.msra.mxu0 0.0
    %1151 = vmatpush.msra.mxu0 0.0
    %1152 = vmatpush.msra.mxu0 0.0
    %1153 = vmatpush.msra.mxu0 0.0
    %1154 = vmatpush.msra.mxu0 %v1131
    %1155 = vmatpush.msra.mxu0 %v1129
    %1156 = vmatmul.f32.gmra.mxu0 %v1135
    %v1157 = vpop.f32.mrf.mxu0
    %v1158 = vadd.f32 0.0, %v1157
    %1159 = vmatmul.f32.gmra.mxu0 %v1138
    %v1160 = vpop.f32.mrf.mxu0
    %v1161 = vadd.f32 0.0, %v1160
    %1162 = vdwg.mxu0
    %v1163 = vld [vmem:[%s884 + $0x48] sm:$0xff]
    %v1165 = vsel %vm209, %v1158, 0
    %v1168 = vsel %vm209, %v1161, 0
    %1170 = vmatpush.msra.mxu0 0.0
    %1171 = vmatpush.msra.mxu0 0.0
    %1172 = vmatpush.msra.mxu0 0.0
    %1173 = vmatpush.msra.mxu0 0.0
    %1174 = vmatpush.msra.mxu0 0.0
    %1175 = vmatpush.msra.mxu0 0.0
    %1176 = vmatpush.msra.mxu0 0.0
    %1177 = vmatpush.msra.mxu0 0.0
    %1178 = vmatpush.msra.mxu0 0.0
    %1179 = vmatpush.msra.mxu0 0.0
    %1180 = vmatpush.msra.mxu0 0.0
    %1181 = vmatpush.msra.mxu0 0.0
    %1182 = vmatpush.msra.mxu0 0.0
    %1183 = vmatpush.msra.mxu0 0.0
    %1184 = vmatpush.msra.mxu0 0.0
    %1185 = vmatpush.msra.mxu0 %v1163
    %1186 = vmatmul.f32.gmra.mxu0 %v1165
    %v1187 = vpop.f32.mrf.mxu0
    %v1188 = vadd.f32 0.0, %v1187
    %1189 = vmatmul.f32.gmra.mxu0 %v1168
    %v1190 = vpop.f32.mrf.mxu0
    %v1191 = vadd.f32 0.0, %v1190
    %1192 = vdwg.mxu0
    %v1194 = vsel %vm209, %v1059, 0
    %v1197 = vsel %vm209, %v1062, 0
    %1199 = vmatpush.msra.mxu0 0.0
    %1200 = vmatpush.msra.mxu0 0.0
    %1201 = vmatpush.msra.mxu0 0.0
    %1202 = vmatpush.msra.mxu0 0.0
    %1203 = vmatpush.msra.mxu0 0.0
    %1204 = vmatpush.msra.mxu0 0.0
    %1205 = vmatpush.msra.mxu0 0.0
    %1206 = vmatpush.msra.mxu0 0.0
    %1207 = vmatpush.msra.mxu0 0.0
    %1208 = vmatpush.msra.mxu0 0.0
    %1209 = vmatpush.msra.mxu0 0.0
    %1210 = vmatpush.msra.mxu0 0.0
    %1211 = vmatpush.msra.mxu0 0.0
    %1212 = vmatpush.msra.mxu0 0.0
    %1213 = vmatpush.msra.mxu0 0.0
    %1214 = vmatpush.msra.mxu0 %v1064
    %1215 = vmatmul.f32.gmra.mxu0 %v1194
    %v1216 = vpop.f32.mrf.mxu0
    %v1217 = vadd.f32 %v1188, %v1216
    %1218 = vmatmul.f32.gmra.mxu0 %v1197
    %v1219 = vpop.f32.mrf.mxu0
    %v1220 = vadd.f32 %v1191, %v1219
    %1221 = vdwg.mxu0
    %1222 = vrot.lane.b32.xlu0 %v941, 112
    %v1223 = vpop.permute.xlu0 %1222
    %1224 = vrot.lane.b32.xlu0 %v944, 112
    %v1225 = vpop.permute.xlu0 %1224
    %1226 = vrot.lane.b32.xlu0 %v941, 80
    %v1227 = vpop.permute.xlu0 %1226
    %1228 = vrot.lane.b32.xlu0 %v944, 80
    %v1229 = vpop.permute.xlu0 %1228
    %v1230 = vsel %vm209, %v1223, 0
    %v1232 = vsel %vm209, %v1225, 0
    %v1234 = vsel %vm209, %v1227, 0
    %v1236 = vsel %vm209, %v1229, 0
    %1238 = vmatpush.xpose.msra.mxu0 0.0
    %1239 = vmatpush.xpose.msra.mxu0 0.0
    %1240 = vmatpush.xpose.msra.mxu0 0.0
    %1241 = vmatpush.xpose.msra.mxu0 0.0
    %1242 = vmatpush.xpose.msra.mxu0 0.0
    %1243 = vmatpush.xpose.msra.mxu0 0.0
    %1244 = vmatpush.xpose.msra.mxu0 0.0
    %1245 = vmatpush.xpose.msra.mxu0 0.0
    %1246 = vmatpush.xpose.msra.mxu0 0.0
    %1247 = vmatpush.xpose.msra.mxu0 0.0
    %1248 = vmatpush.xpose.msra.mxu0 0.0
    %1249 = vmatpush.xpose.msra.mxu0 0.0
    %1250 = vmatpush.xpose.msra.mxu0 0.0
    %1251 = vmatpush.xpose.msra.mxu0 0.0
    %1252 = vmatpush.xpose.msra.mxu0 %v1236
    %1253 = vmatpush.xpose.msra.mxu0 %v1234
    %1254 = vmatmul.f32.gmra.mxu0 %v1230
    %v1255 = vpop.f32.mrf.mxu0
    %v1256 = vadd.f32 %v109, %v1255
    %1257 = vmatmul.f32.gmra.mxu0 %v1232
    %v1258 = vpop.f32.mrf.mxu0
    %v1259 = vadd.f32 %v110, %v1258
    %1260 = vdwg.mxu0
    %v1261 = vsel %vm241, %v1256, -inf
    %1262 = vmax.xlane.f32.xlu0 %v1261
    %v1263 = vpop.xlane.xlu0 %1262
    %v1264 = vsel %vm241, %v1259, -inf
    %1265 = vmax.xlane.f32.xlu0 %v1264
    %v1266 = vpop.xlane.xlu0 %1265
    %v1267 = vsub.f32 %v1256, %v1263
    %v1268 = vsub.f32 %v1259, %v1266
    %v1269 = vmul.f32 %v1267, 1.442695
    %v1270 = vpow.pop %v1269
    %v1271 = vmul.f32 %v1268, 1.442695
    %v1272 = vpow.pop %v1271
    %v1273 = vsel %vm241, %v1270, 0.0
    %1274 = vadd.xlane.f32.xlu0 %v1273
    %v1275 = vpop.xlane.xlu0 %1274
    %v1276 = vsel %vm241, %v1272, 0.0
    %1277 = vadd.xlane.f32.xlu0 %v1276
    %v1278 = vpop.xlane.xlu0 %1277
    %v1279 = vrcp.pop %v1275
    %v1280 = vrcp.pop %v1278
    %v1281 = vmul.f32 %v1270, %v1279
    %v1282 = vmul.f32 %v1272, %v1280
    %1283 = vrot.lane.b32.xlu0 %v971, 112
    %v1284 = vpop.permute.xlu0 %1283
    %1285 = vrot.lane.b32.xlu0 %v974, 112
    %v1286 = vpop.permute.xlu0 %1285
    %v1290 = vsel %vm241, %v1281, 0
    %v1293 = vsel %vm241, %v1282, 0
    %1295 = vmatpush.msra.mxu0 0.0
    %1296 = vmatpush.msra.mxu0 0.0
    %1297 = vmatpush.msra.mxu0 0.0
    %1298 = vmatpush.msra.mxu0 0.0
    %1299 = vmatpush.msra.mxu0 0.0
    %1300 = vmatpush.msra.mxu0 0.0
    %1301 = vmatpush.msra.mxu0 0.0
    %1302 = vmatpush.msra.mxu0 0.0
    %1303 = vmatpush.msra.mxu0 0.0
    %1304 = vmatpush.msra.mxu0 0.0
    %1305 = vmatpush.msra.mxu0 0.0
    %1306 = vmatpush.msra.mxu0 0.0
    %1307 = vmatpush.msra.mxu0 0.0
    %1308 = vmatpush.msra.mxu0 0.0
    %1309 = vmatpush.msra.mxu0 %v1286
    %1310 = vmatpush.msra.mxu0 %v1284
    %1311 = vmatmul.f32.gmra.mxu0 %v1290
    %v1312 = vpop.f32.mrf.mxu0
    %v1313 = vadd.f32 0.0, %v1312
    %1314 = vmatmul.f32.gmra.mxu0 %v1293
    %v1315 = vpop.f32.mrf.mxu0
    %v1316 = vadd.f32 0.0, %v1315
    %1317 = vdwg.mxu0
    %v1318 = vld [vmem:[%s884 + $0x50] sm:$0xff]
    %v1320 = vsel %vm209, %v1313, 0
    %v1323 = vsel %vm209, %v1316, 0
    %1325 = vmatpush.msra.mxu0 0.0
    %1326 = vmatpush.msra.mxu0 0.0
    %1327 = vmatpush.msra.mxu0 0.0
    %1328 = vmatpush.msra.mxu0 0.0
    %1329 = vmatpush.msra.mxu0 0.0
    %1330 = vmatpush.msra.mxu0 0.0
    %1331 = vmatpush.msra.mxu0 0.0
    %1332 = vmatpush.msra.mxu0 0.0
    %1333 = vmatpush.msra.mxu0 0.0
    %1334 = vmatpush.msra.mxu0 0.0
    %1335 = vmatpush.msra.mxu0 0.0
    %1336 = vmatpush.msra.mxu0 0.0
    %1337 = vmatpush.msra.mxu0 0.0
    %1338 = vmatpush.msra.mxu0 0.0
    %1339 = vmatpush.msra.mxu0 0.0
    %1340 = vmatpush.msra.mxu0 %v1318
    %1341 = vmatmul.f32.gmra.mxu0 %v1320
    %v1342 = vpop.f32.mrf.mxu0
    %v1343 = vadd.f32 0.0, %v1342
    %1344 = vmatmul.f32.gmra.mxu0 %v1323
    %v1345 = vpop.f32.mrf.mxu0
    %v1346 = vadd.f32 0.0, %v1345
    %1347 = vdwg.mxu0
    %v1348 = vadd.f32 %v1217, %v1343
    %v1349 = vadd.f32 %v1220, %v1346
    %1350 = vrot.lane.b32.xlu0 %v941, 104
    %v1351 = vpop.permute.xlu0 %1350
    %1352 = vrot.lane.b32.xlu0 %v944, 104
    %v1353 = vpop.permute.xlu0 %1352
    %1354 = vrot.lane.b32.xlu0 %v941, 72
    %v1355 = vpop.permute.xlu0 %1354
    %1356 = vrot.lane.b32.xlu0 %v944, 72
    %v1357 = vpop.permute.xlu0 %1356
    %v1358 = vsel %vm209, %v1351, 0
    %v1360 = vsel %vm209, %v1353, 0
    %v1362 = vsel %vm209, %v1355, 0
    %v1364 = vsel %vm209, %v1357, 0
    %1366 = vmatpush.xpose.msra.mxu0 0.0
    %1367 = vmatpush.xpose.msra.mxu0 0.0
    %1368 = vmatpush.xpose.msra.mxu0 0.0
    %1369 = vmatpush.xpose.msra.mxu0 0.0
    %1370 = vmatpush.xpose.msra.mxu0 0.0
    %1371 = vmatpush.xpose.msra.mxu0 0.0
    %1372 = vmatpush.xpose.msra.mxu0 0.0
    %1373 = vmatpush.xpose.msra.mxu0 0.0
    %1374 = vmatpush.xpose.msra.mxu0 0.0
    %1375 = vmatpush.xpose.msra.mxu0 0.0
    %1376 = vmatpush.xpose.msra.mxu0 0.0
    %1377 = vmatpush.xpose.msra.mxu0 0.0
    %1378 = vmatpush.xpose.msra.mxu0 0.0
    %1379 = vmatpush.xpose.msra.mxu0 0.0
    %1380 = vmatpush.xpose.msra.mxu0 %v1364
    %1381 = vmatpush.xpose.msra.mxu0 %v1362
    %1382 = vmatmul.f32.gmra.mxu0 %v1358
    %v1383 = vpop.f32.mrf.mxu0
    %v1384 = vadd.f32 %v109, %v1383
    %1385 = vmatmul.f32.gmra.mxu0 %v1360
    %v1386 = vpop.f32.mrf.mxu0
    %v1387 = vadd.f32 %v110, %v1386
    %1388 = vdwg.mxu0
    %v1389 = vsel %vm241, %v1384, -inf
    %1390 = vmax.xlane.f32.xlu0 %v1389
    %v1391 = vpop.xlane.xlu0 %1390
    %v1392 = vsel %vm241, %v1387, -inf
    %1393 = vmax.xlane.f32.xlu0 %v1392
    %v1394 = vpop.xlane.xlu0 %1393
    %v1395 = vsub.f32 %v1384, %v1391
    %v1396 = vsub.f32 %v1387, %v1394
    %v1397 = vmul.f32 %v1395, 1.442695
    %v1398 = vpow.pop %v1397
    %v1399 = vmul.f32 %v1396, 1.442695
    %v1400 = vpow.pop %v1399
    %v1401 = vsel %vm241, %v1398, 0.0
    %1402 = vadd.xlane.f32.xlu0 %v1401
    %v1403 = vpop.xlane.xlu0 %1402
    %v1404 = vsel %vm241, %v1400, 0.0
    %1405 = vadd.xlane.f32.xlu0 %v1404
    %v1406 = vpop.xlane.xlu0 %1405
    %v1407 = vrcp.pop %v1403
    %v1408 = vrcp.pop %v1406
    %v1409 = vmul.f32 %v1398, %v1407
    %v1410 = vmul.f32 %v1400, %v1408
    %1411 = vrot.lane.b32.xlu0 %v971, 104
    %v1412 = vpop.permute.xlu0 %1411
    %1413 = vrot.lane.b32.xlu0 %v974, 104
    %v1414 = vpop.permute.xlu0 %1413
    %v1418 = vsel %vm241, %v1409, 0
    %v1421 = vsel %vm241, %v1410, 0
    %1423 = vmatpush.msra.mxu0 0.0
    %1424 = vmatpush.msra.mxu0 0.0
    %1425 = vmatpush.msra.mxu0 0.0
    %1426 = vmatpush.msra.mxu0 0.0
    %1427 = vmatpush.msra.mxu0 0.0
    %1428 = vmatpush.msra.mxu0 0.0
    %1429 = vmatpush.msra.mxu0 0.0
    %1430 = vmatpush.msra.mxu0 0.0
    %1431 = vmatpush.msra.mxu0 0.0
    %1432 = vmatpush.msra.mxu0 0.0
    %1433 = vmatpush.msra.mxu0 0.0
    %1434 = vmatpush.msra.mxu0 0.0
    %1435 = vmatpush.msra.mxu0 0.0
    %1436 = vmatpush.msra.mxu0 0.0
    %1437 = vmatpush.msra.mxu0 %v1414
    %1438 = vmatpush.msra.mxu0 %v1412
    %1439 = vmatmul.f32.gmra.mxu0 %v1418
    %v1440 = vpop.f32.mrf.mxu0
    %v1441 = vadd.f32 0.0, %v1440
    %1442 = vmatmul.f32.gmra.mxu0 %v1421
    %v1443 = vpop.f32.mrf.mxu0
    %v1444 = vadd.f32 0.0, %v1443
    %1445 = vdwg.mxu0
    %v1446 = vld [vmem:[%s884 + $0x58] sm:$0xff]
    %v1448 = vsel %vm209, %v1441, 0
    %v1451 = vsel %vm209, %v1444, 0
    %1453 = vmatpush.msra.mxu0 0.0
    %1454 = vmatpush.msra.mxu0 0.0
    %1455 = vmatpush.msra.mxu0 0.0
    %1456 = vmatpush.msra.mxu0 0.0
    %1457 = vmatpush.msra.mxu0 0.0
    %1458 = vmatpush.msra.mxu0 0.0
    %1459 = vmatpush.msra.mxu0 0.0
    %1460 = vmatpush.msra.mxu0 0.0
    %1461 = vmatpush.msra.mxu0 0.0
    %1462 = vmatpush.msra.mxu0 0.0
    %1463 = vmatpush.msra.mxu0 0.0
    %1464 = vmatpush.msra.mxu0 0.0
    %1465 = vmatpush.msra.mxu0 0.0
    %1466 = vmatpush.msra.mxu0 0.0
    %1467 = vmatpush.msra.mxu0 0.0
    %1468 = vmatpush.msra.mxu0 %v1446
    %1469 = vmatmul.f32.gmra.mxu0 %v1448
    %v1470 = vpop.f32.mrf.mxu0
    %v1471 = vadd.f32 0.0, %v1470
    %1472 = vmatmul.f32.gmra.mxu0 %v1451
    %v1473 = vpop.f32.mrf.mxu0
    %v1474 = vadd.f32 0.0, %v1473
    %1475 = vdwg.mxu0
    %v1476 = vadd.f32 %v1348, %v1471
    %v1477 = vadd.f32 %v1349, %v1474
    %v1478 = vperm.slane %v907, 0
    %v1479 = vadd.f32 %v1476, %v1478
    %v1480 = vadd.f32 %v1477, %v1478
    %v1481 = vadd.f32 %v882, %v1479
    %v1482 = vadd.f32 %v883, %v1480
    %v1483 = vsel %vm143, %v1481, 0.0
    %1484 = vadd.xlane.f32.xlu0 %v1483
    %v1485 = vpop.xlane.xlu0 %1484
    %v1486 = vsel %vm143, %v1482, 0.0
    %1487 = vadd.xlane.f32.xlu0 %v1486
    %v1488 = vpop.xlane.xlu0 %1487
    %v1489 = vmul.f32 %v1485, %v724
    %v1490 = vmul.f32 %v1488, %v724
    %v1491 = vsub.f32 %v1481, %v1489
    %v1492 = vsub.f32 %v1482, %v1490
    %v1493 = vmul.f32 %v1491, %v1491
    %v1494 = vmul.f32 %v1492, %v1492
    %v1495 = vsel %vm143, %v1493, 0.0
    %1496 = vadd.xlane.f32.xlu0 %v1495
    %v1497 = vpop.xlane.xlu0 %1496
    %v1498 = vsel %vm143, %v1494, 0.0
    %1499 = vadd.xlane.f32.xlu0 %v1498
    %v1500 = vpop.xlane.xlu0 %1499
    %v1501 = vmul.f32 %v1497, %v724
    %v1502 = vmul.f32 %v1500, %v724
    %v1503 = vadd.f32 %v1501, 1e-05
    %v1504 = vadd.f32 %v1502, 1e-05
    %v1505 = vrsqrt.pop %v1503
    %v1506 = vmul.f32 %v1505, %v1503
    %v1507 = vmul.f32 %v1506, %v1505
    %v1508 = vmul.f32 0.5, %v1507
    %v1509 = vsub.f32 1.5, %v1508
    %v1510 = vmul.f32 %v1505, %v1509
    %vm1511 = vweird.f32 %v1503
    %vm1512 = vweird.f32 %v1505
    %vm1513 = vmor %vm1511, %vm1512
    %v1514 = vsel %vm1513, %v1505, %v1510
    %v1515 = vrsqrt.pop %v1504
    %v1516 = vmul.f32 %v1515, %v1504
    %v1517 = vmul.f32 %v1516, %v1515
    %v1518 = vmul.f32 0.5, %v1517
    %v1519 = vsub.f32 1.5, %v1518
    %v1520 = vmul.f32 %v1515, %v1519
    %vm1521 = vweird.f32 %v1504
    %vm1522 = vweird.f32 %v1515
    %vm1523 = vmor %vm1521, %vm1522
    %v1524 = vsel %vm1523, %v1515, %v1520
    %v1525 = vmul.f32 %v1491, %v1514
    %v1526 = vmul.f32 %v1492, %v1524
    %v1527 = vperm.slane %v910, 0
    %v1528 = vmul.f32 %v1525, %v1527
    %v1529 = vmul.f32 %v1526, %v1527
    %v1530 = vperm.slane %v911, 0
    %v1531 = vadd.f32 %v1528, %v1530
    %v1532 = vadd.f32 %v1529, %v1530
    %v1533 = vperm.slane %v908, 0
    %v1535 = vsel %vm143, %v1531, 0
    %v1538 = vsel %vm143, %v1532, 0
    %1540 = vmatpush.msra.mxu0 0.0
    %1541 = vmatpush.msra.mxu0 0.0
    %1542 = vmatpush.msra.mxu0 0.0
    %1543 = vmatpush.msra.mxu0 0.0
    %1544 = vmatpush.msra.mxu0 0.0
    %1545 = vmatpush.msra.mxu0 0.0
    %1546 = vmatpush.msra.mxu0 0.0
    %1547 = vmatpush.msra.mxu0 0.0
    %1548 = vmatpush.msra.mxu0 0.0
    %1549 = vmatpush.msra.mxu0 0.0
    %1550 = vmatpush.msra.mxu0 0.0
    %1551 = vmatpush.msra.mxu0 0.0
    %1552 = vmatpush.msra.mxu0 %v896
    %1553 = vmatpush.msra.mxu0 %v895
    %1554 = vmatpush.msra.mxu0 %v894
    %1555 = vmatpush.msra.mxu0 %v893
    %1556 = vmatmul.f32.gmra.mxu0 %v1535
    %v1557 = vpop.f32.mrf.mxu0
    %v1558 = vadd.f32 %v1533, %v1557
    %1559 = vmatmul.f32.gmra.mxu0 %v1538
    %v1560 = vpop.f32.mrf.mxu0
    %v1561 = vadd.f32 %v1533, %v1560
    %1562 = vdwg.mxu0
    %v1563 = vmax.f32 %v1558, 0.0
    %v1564 = vmax.f32 %v1561, 0.0
    %v1565 = vperm.slane %v909, 0
    %v1567 = vsel %vm802, %v1563, 0
    %v1570 = vsel %vm802, %v1564, 0
    %1572 = vmatpush.msra.mxu0 0.0
    %1573 = vmatpush.msra.mxu0 0.0
    %1574 = vmatpush.msra.mxu0 0.0
    %1575 = vmatpush.msra.mxu0 0.0
    %1576 = vmatpush.msra.mxu0 0.0
    %1577 = vmatpush.msra.mxu0 0.0
    %1578 = vmatpush.msra.mxu0 0.0
    %1579 = vmatpush.msra.mxu0 0.0
    %1580 = vmatpush.msra.mxu0 %v904
    %1581 = vmatpush.msra.mxu0 %v903
    %1582 = vmatpush.msra.mxu0 %v902
    %1583 = vmatpush.msra.mxu0 %v901
    %1584 = vmatpush.msra.mxu0 %v900
    %1585 = vmatpush.msra.mxu0 %v899
    %1586 = vmatpush.msra.mxu0 %v898
    %1587 = vmatpush.msra.mxu0 %v897
    %1588 = vmatmul.f32.gmra.mxu0 %v1567
    %v1589 = vpop.f32.mrf.mxu0
    %v1590 = vadd.f32 %v1565, %v1589
    %1591 = vmatmul.f32.gmra.mxu0 %v1570
    %v1592 = vpop.f32.mrf.mxu0
    %v1593 = vadd.f32 %v1565, %v1592
    %1594 = vdwg.mxu0
    %v1595 = vadd.f32 %v1531, %v1590
    %v1596 = vadd.f32 %v1532, %v1593
    %v1597 = vsel %vm143, %v1595, 0.0
    %1598 = vadd.xlane.f32.xlu0 %v1597
    %v1599 = vpop.xlane.xlu0 %1598
    %v1600 = vsel %vm143, %v1596, 0.0
    %1601 = vadd.xlane.f32.xlu0 %v1600
    %v1602 = vpop.xlane.xlu0 %1601
    %v1603 = vmul.f32 %v1599, %v724
    %v1604 = vmul.f32 %v1602, %v724
    %v1605 = vsub.f32 %v1595, %v1603
    %v1606 = vsub.f32 %v1596, %v1604
    %v1607 = vmul.f32 %v1605, %v1605
    %v1608 = vmul.f32 %v1606, %v1606
    %v1609 = vsel %vm143, %v1607, 0.0
    %1610 = vadd.xlane.f32.xlu0 %v1609
    %v1611 = vpop.xlane.xlu0 %1610
    %v1612 = vsel %vm143, %v1608, 0.0
    %1613 = vadd.xlane.f32.xlu0 %v1612
    %v1614 = vpop.xlane.xlu0 %1613
    %v1615 = vmul.f32 %v1611, %v724
    %v1616 = vmul.f32 %v1614, %v724
    %v1617 = vadd.f32 %v1615, 1e-05
    %v1618 = vadd.f32 %v1616, 1e-05
    %v1619 = vrsqrt.pop %v1617
    %v1620 = vmul.f32 %v1619, %v1617
    %v1621 = vmul.f32 %v1620, %v1619
    %v1622 = vmul.f32 0.5, %v1621
    %v1623 = vsub.f32 1.5, %v1622
    %v1624 = vmul.f32 %v1619, %v1623
    %vm1625 = vweird.f32 %v1617
    %vm1626 = vweird.f32 %v1619
    %vm1627 = vmor %vm1625, %vm1626
    %v1628 = vsel %vm1627, %v1619, %v1624
    %v1629 = vrsqrt.pop %v1618
    %v1630 = vmul.f32 %v1629, %v1618
    %v1631 = vmul.f32 %v1630, %v1629
    %v1632 = vmul.f32 0.5, %v1631
    %v1633 = vsub.f32 1.5, %v1632
    %v1634 = vmul.f32 %v1629, %v1633
    %vm1635 = vweird.f32 %v1618
    %vm1636 = vweird.f32 %v1629
    %vm1637 = vmor %vm1635, %vm1636
    %v1638 = vsel %vm1637, %v1629, %v1634
    %v1639 = vmul.f32 %v1605, %v1628
    %v1640 = vmul.f32 %v1606, %v1638
    %v1641 = vperm.slane %v912, 0
    %v1642 = vmul.f32 %v1639, %v1641
    %v1643 = vmul.f32 %v1640, %v1641
    %v1644 = vperm.slane %v913, 0
    %v1645 = vadd.f32 %v1642, %v1644
    %v1646 = vadd.f32 %v1643, %v1644
    %1647 = vst.msk [vmem:[#allocation8] sm:$0xff] %vm143, %v1645
    %1648 = vst.msk [vmem:[#allocation8 + $0x8] sm:$0xff] %vm143, %v1646
    // Predicated region
    $region26: #{tpu_custom_call.1} parent=1 // pred_check
      _
    $region27: #{tpu_custom_call.1} parent=1 // pred_check_branch
      %1650 = sbr.rel (0) target = $region29
    $region28: #{tpu_custom_call.1} parent=1 // pred_region
      %1652 = vsyncadd [#allocation4], 0
      %s1653 = sshll.u32 [#allocation8], 4
      %s1654 = int_to_ptr.vmem [resolvable:$true] %s1653
      %s1655 = sshll.u32 %s3, 4
      %s1656 = int_to_ptr.hbm [resolvable:$true] %s1655
      %1661 = dma.vmem_to_hbm [thread:$0]  %s1654, 256, %s1656, [#allocation4], 128, 128, 8
    $region29: #{tpu_custom_call.1} parent=1 // pred_fallthru
      _
    // Predicated region
    $region30: #{tpu_custom_call.1} parent=1 // pred_check
      _
    $region31: #{tpu_custom_call.1} parent=1 // pred_check_branch
      %1663 = sbr.rel (0) target = $region33
    $region32: #{tpu_custom_call.1} parent=1 // pred_region
      %1665 = dma.done [#allocation4], 256
    $region33: #{tpu_custom_call.1} parent=1 // pred_fallthru
      _
    %1666 = vsyncpa [#allocation3], 1
    %1667 = vsyncpa [#allocation6], 1
    %1668 = vsyncpa [#allocation4], 1

</llo_original>
